<compile_context>
chip_gen: v6e
topology: v6e:2x2x1
jax: 0.10.0
libtpu: 0.0.40
codegen_flags: <defaults>
</compile_context>

<pallas_src>
import functools
import math

import jax
import jax.numpy as jnp
from jax import lax
from jax.experimental import pallas as pl
from jax.experimental.pallas import tpu as pltpu


# ----------------------------------------------------------------------------
# Pallas kernel: one T-chunk of the fused (fwd + bwd) GRU recurrence.
# grid = (T // tc,) sequential ("arbitrary"); hidden carried in VMEM scratch.
# ----------------------------------------------------------------------------
def _bigru_fused_kernel(gi_ref, whh_ref, bhn_ref, out_ref, h_ref, *, unroll):
    """gi_ref : (TC, B, 6H) f32   x@W_ih^T + b_ih (+ b_hr/b_hz folded in),
                                  gate layout [r_f|r_b|z_f|z_b|n_f|n_b],
                                  backward direction already time-reversed.
       whh_ref: (2H, 6H)    bf16  block-diagonal W_hh^T (fwd rows 0:H, bwd H:2H).
       bhn_ref: (1, 2H)     f32   [b_hn_fwd | b_hn_bwd].
       out_ref: (TC, B, 2H) f32   combined hidden [h_fwd(t) | h_bwd(T-1-t)].
       h_ref  : (B, 2H)     f32   carried hidden state across chunks (scratch).
    """
    @pl.when(pl.program_id(0) == 0)
    def _():
        h_ref[...] = jnp.zeros_like(h_ref)          # PyTorch default h0 = 0

    tc, B, sixH = gi_ref.shape
    H2 = sixH // 3

    whh = whh_ref[...]                              # (2H, 6H) bf16, loop-resident
    bhn = jnp.broadcast_to(bhn_ref[...], (B, H2))   # hoisted: once per chunk

    def sigmoid(x):                                 # EUP tanh, no VPU divide
        return 0.5 * (jnp.tanh(0.5 * x) + 1.0)

    def step(s, h):
        gi_t = gi_ref[s]                            # (B, 6H) sequential load
        # Only this matmul is on the serial (h-dependent) critical path.
        gh = jnp.dot(h.astype(jnp.bfloat16), whh,
                     preferred_element_type=jnp.float32)          # (B, 6H)
        r = sigmoid(gi_t[:, 0:H2] + gh[:, 0:H2])                  # lane-aligned
        z = sigmoid(gi_t[:, H2:2 * H2] + gh[:, H2:2 * H2])
        n = jnp.tanh(gi_t[:, 2 * H2:] + r * (gh[:, 2 * H2:] + bhn))
        h_new = (1.0 - z) * n + z * h
        out_ref[s] = h_new                          # lane-dense (B, 2H) store
        return h_new

    h_ref[...] = lax.fori_loop(0, tc, step, h_ref[...], unroll=unroll)


def bigru_layer_pallas(gi, whh_blk, bhn, *, max_chunk=256):
    """Both directions of one bidirectional GRU layer, fused, in one pallas_call.

    gi:      (T, B, 6H) f32  precomputed input gates (bwd half time-reversed)
    whh_blk: (2H, 6H)   bf16 block-diagonal recurrent weights
    bhn:     (1, 2H)    f32
    Returns outs (T, B, 2H): outs[t, :, :H]  = fwd hidden at time t,
                             outs[t, :, H:]  = bwd hidden at time T-1-t.
    """
    T, B, sixH = gi.shape
    H2 = sixH // 3
    # Chunk T so the double-buffered gi/out blocks stay well under v7x's
    # 64 MiB VMEM (v5e/v6e have 128 MiB and could take ~2-3x larger chunks).
    tc = min(T, max_chunk)
    while T % tc:
        tc -= 1
    unroll = True if tc <= 16 else 8                # keep the dep-chain visible
    kernel = functools.partial(_bigru_fused_kernel, unroll=unroll)
    return pl.pallas_call(
        kernel,
        out_shape=jax.ShapeDtypeStruct((T, B, H2), jnp.float32),
        grid=(T // tc,),
        in_specs=[
            pl.BlockSpec((tc, B, sixH), lambda c: (c, 0, 0)),
            pl.BlockSpec((H2, sixH), lambda c: (0, 0)),
            pl.BlockSpec((1, H2), lambda c: (0, 0)),
        ],
        out_specs=pl.BlockSpec((tc, B, H2), lambda c: (c, 0, 0)),
        scratch_shapes=[pltpu.VMEM((B, H2), jnp.float32)],
        compiler_params=pltpu.CompilerParams(
            dimension_semantics=("arbitrary",),     # chunks carry hidden state
            vmem_limit_bytes=64 * 1024 * 1024,
        ),
    )(gi, whh_blk, bhn)


# ----------------------------------------------------------------------------
# Encoder forward (Pallas path).
# ----------------------------------------------------------------------------
def encoder_forward(src, params):
    x = params["embedding"][src]                    # (T, B, E) gather (XLA glue)
    T, B, _ = x.shape
    hidden = []
    for fwd, bwd in params["layers"]:
        w_ih_f, w_hh_f, b_ih_f, b_hh_f = fwd
        w_ih_b, w_hh_b, b_ih_b, b_hh_b = bwd
        H = w_hh_f.shape[1]

        # Hoisted input projection: one big MXU matmul per direction over all
        # timesteps, with b_ih and the h-independent b_hr / b_hz folded in
        # (b_hn stays in the kernel -- PyTorch multiplies it by r).
        zero_n = jnp.zeros((H,), jnp.float32)
        bias_f = b_ih_f + jnp.concatenate([b_hh_f[:2 * H], zero_n])
        bias_b = b_ih_b + jnp.concatenate([b_hh_b[:2 * H], zero_n])
        gi_f = jnp.einsum("tbi,gi->tbg", x, w_ih_f) + bias_f        # (T, B, 3H)
        gi_b = jnp.einsum("tbi,gi->tbg", x, w_ih_b) + bias_b
        gi_b = gi_b[::-1]                           # time-reverse bwd direction

        # Regroup gates -> [r_f|r_b|z_f|z_b|n_f|n_b]: lane-aligned slices.
        gi = jnp.stack([gi_f.reshape(T, B, 3, H),
                        gi_b.reshape(T, B, 3, H)], axis=3).reshape(T, B, 6 * H)

        # Block-diagonal recurrent weights: one (2H, 6H) matrix drives both
        # directions with a single (B,2H)x(2H,6H) dot per timestep.
        blk = jnp.zeros((2, H, 3, 2, H), jnp.float32)
        blk = blk.at[0, :, :, 0, :].set(w_hh_f.T.reshape(H, 3, H))
        blk = blk.at[1, :, :, 1, :].set(w_hh_b.T.reshape(H, 3, H))
        whh_blk = blk.reshape(2 * H, 6 * H).astype(jnp.bfloat16)

        bhn = jnp.concatenate([b_hh_f[2 * H:], b_hh_b[2 * H:]])[None, :]  # (1,2H)

        outs = bigru_layer_pallas(gi, whh_blk, bhn)                 # (T, B, 2H)

        hidden.append(outs[T - 1, :, :H])           # final fwd hidden (B, H)
        hidden.append(outs[T - 1, :, H:])           # final bwd hidden (B, H)
        # Next layer input: [out_fwd(t) | out_bwd(t)] (bwd half un-reversed).
        x = jnp.concatenate([outs[:, :, :H], outs[::-1, :, H:]], axis=-1)
    return jnp.stack(hidden, axis=0)                # (n_layers * 2, B, H)


# ----------------------------------------------------------------------------
# Pure-JAX reference mirroring the PyTorch structure (independent of the
# restructured Pallas data layout) for correctness checking.
# ----------------------------------------------------------------------------
def gru_direction_ref(x, w_ih, w_hh, b_ih, b_hh):
    T, B, In = x.shape
    H = w_hh.shape[1]

    def step(h, x_t):
        gi = x_t @ w_ih.T + b_ih
        gh = h @ w_hh.T + b_hh
        r = jax.nn.sigmoid(gi[:, :H] + gh[:, :H])
        z = jax.nn.sigmoid(gi[:, H:2 * H] + gh[:, H:2 * H])
        n = jnp.tanh(gi[:, 2 * H:] + r * gh[:, 2 * H:])
        h_new = (1.0 - z) * n + z * h
        return h_new, h_new

    h0 = jnp.zeros((B, H), jnp.float32)
    h_fin, outs = lax.scan(step, h0, x)
    return outs, h_fin


def encoder_forward_ref(src, params):
    x = params["embedding"][src]
    hidden = []
    for fwd, bwd in params["layers"]:
        w_ih_f, w_hh_f, b_ih_f, b_hh_f = fwd
        w_ih_b, w_hh_b, b_ih_b, b_hh_b = bwd
        outs_f, h_f = gru_direction_ref(x, w_ih_f, w_hh_f, b_ih_f, b_hh_f)
        outs_b_rev, h_b = gru_direction_ref(x[::-1], w_ih_b, w_hh_b, b_ih_b, b_hh_b)
        outs_b = outs_b_rev[::-1]
        hidden.append(h_f)
        hidden.append(h_b)
        x = jnp.concatenate([outs_f, outs_b], axis=-1)
    return jnp.stack(hidden, axis=0)


# ----------------------------------------------------------------------------
# Deterministic parameter initialization (PyTorch-style shapes / init).
# ----------------------------------------------------------------------------
def init_params(key, input_dim, emb_dim, hid_dim, n_layers):
    n_keys = 1 + n_layers * 2 * 4
    keys = jax.random.split(key, n_keys)
    params = {
        "embedding": jax.random.normal(keys[0], (input_dim, emb_dim), jnp.float32),
    }
    bound = 1.0 / math.sqrt(hid_dim)
    layers = []
    ki = 1
    for layer in range(n_layers):
        in_dim = emb_dim if layer == 0 else 2 * hid_dim
        dirs = []
        for _direction in range(2):
            w_ih = jax.random.uniform(keys[ki], (3 * hid_dim, in_dim),
                                      jnp.float32, -bound, bound); ki += 1
            w_hh = jax.random.uniform(keys[ki], (3 * hid_dim, hid_dim),
                                      jnp.float32, -bound, bound); ki += 1
            b_ih = jax.random.uniform(keys[ki], (3 * hid_dim,),
                                      jnp.float32, -bound, bound); ki += 1
            b_hh = jax.random.uniform(keys[ki], (3 * hid_dim,),
                                      jnp.float32, -bound, bound); ki += 1
            dirs.append((w_ih, w_hh, b_ih, b_hh))
        layers.append(tuple(dirs))
    params["layers"] = layers
    return params


if __name__ == "__main__":
    # Small shapes consistent with the module: src is (seq_len, batch) ids.
    # hid_dim = 64 -> combined 2H = 128 keeps every gate slice lane-aligned.
    input_dim = 50     # vocab size
    emb_dim = 64
    hid_dim = 64
    n_layers = 2
    seq_len = 8
    batch = 8

    key = jax.random.PRNGKey(0)
    k_param, k_src = jax.random.split(key)
    params = init_params(k_param, input_dim, emb_dim, hid_dim, n_layers)
    src = jax.random.randint(k_src, (seq_len, batch), 0, input_dim, dtype=jnp.int32)

    encoder_fn = jax.jit(encoder_forward)
    hidden = jax.block_until_ready(encoder_fn(src, params))
    assert hidden.shape == (n_layers * 2, batch, hid_dim), hidden.shape

    # Correctness check against an independent pure-JAX f32 reference.
    # Tolerance is relaxed vs v1 because the recurrent matmul now uses bf16
    # operands (f32 accumulation) per the perf review.
    hidden_ref = jax.block_until_ready(encoder_forward_ref(src, params))
    max_err = float(jnp.max(jnp.abs(hidden - hidden_ref)))
    assert max_err < 5e-2, max_err

    print("KERNEL_OK")
</pallas_src>

<mosaic_0001>
module attributes {stable_mosaic.version = 11 : i64} {
  func.func @_bigru_fused_kernel(%arg0: i32, %arg1: memref<8x8x384xf32, #tpu.memory_space<vmem>>, %arg2: memref<128x384xbf16, #tpu.memory_space<vmem>>, %arg3: memref<1x128xf32, #tpu.memory_space<vmem>>, %arg4: memref<8x8x128xf32, #tpu.memory_space<vmem>>, %arg5: memref<8x128xf32, #tpu.memory_space<vmem>>) attributes {dimension_semantics = [#tpu.dimension_semantics<arbitrary>], iteration_bounds = array<i64: 1>, scalar_prefetch = 0 : i64, scratch_operands = 1 : i64, tpu.core_type = #tpu.core_type<tc>, window_params = [{transform_indices = @transform_0, window_bounds = array<i64: 8, 8, 384>}, {pipeline_mode = #tpu.pipeline_mode<synchronous>, transform_indices = @transform_1, window_bounds = array<i64: 128, 384>}, {pipeline_mode = #tpu.pipeline_mode<synchronous>, transform_indices = @transform_2, window_bounds = array<i64: 1, 128>}, {transform_indices = @transform_3, window_bounds = array<i64: 8, 8, 128>}]} {
    %c0_i32 = arith.constant 0 : i32
    %0 = arith.cmpi eq, %arg0, %c0_i32 : i32
    %1 = arith.extui %0 : i1 to i32
    %c0_i32_0 = arith.constant 0 : i32
    %2 = arith.cmpi ne, %1, %c0_i32_0 : i32
    scf.if %2 {
      %cst_104 = arith.constant 0.000000e+00 : f32
      %329 = vector.broadcast %cst_104 : f32 to vector<8x128xf32>
      %c0_105 = arith.constant 0 : index
      %c0_106 = arith.constant 0 : index
      %330 = vector.load %arg5[%c0_105, %c0_106] : memref<8x128xf32, #tpu.memory_space<vmem>>, vector<8x128xf32>
      tpu.vector_store %arg5[%c0_105, %c0_106], %329 {strides = array<i32>} : memref<8x128xf32, #tpu.memory_space<vmem>>, vector<8x128xf32>,
    } else {
    }
    %c0 = arith.constant 0 : index
    %c0_1 = arith.constant 0 : index
    %3 = vector.load %arg2[%c0, %c0_1] : memref<128x384xbf16, #tpu.memory_space<vmem>>, vector<128x384xbf16>
    %c0_2 = arith.constant 0 : index
    %c0_3 = arith.constant 0 : index
    %4 = vector.load %arg3[%c0_2, %c0_3] : memref<1x128xf32, #tpu.memory_space<vmem>>, vector<1x128xf32>
    %5 = vector.shape_cast %4 : vector<1x128xf32> to vector<1x128xf32>
    %6 = vector.broadcast %5 : vector<1x128xf32> to vector<8x128xf32>
    %c0_4 = arith.constant 0 : index
    %c0_5 = arith.constant 0 : index
    %7 = vector.load %arg5[%c0_4, %c0_5] : memref<8x128xf32, #tpu.memory_space<vmem>>, vector<8x128xf32>
    %c0_i32_6 = arith.constant 0 : i32
    %8 = arith.index_cast %c0_i32_6 : i32 to index
    %c0_7 = arith.constant 0 : index
    %c0_8 = arith.constant 0 : index
    %9 = vector.load %arg1[%8, %c0_7, %c0_8] : memref<8x8x384xf32, #tpu.memory_space<vmem>>, vector<1x8x384xf32>
    %10 = vector.shape_cast %9 : vector<1x8x384xf32> to vector<8x384xf32>
    %11 = arith.truncf %7 : vector<8x128xf32> to vector<8x128xbf16>
    %cst = arith.constant dense<0.000000e+00> : vector<8x384xf32>
    %12 = tpu.matmul %11, %3, %cst {dimension_numbers = #tpu.dot_dimension_numbers<[1], [0], [0], [1], [0, 0, 1, 1], [], []>} : vector<8x128xbf16>, vector<128x384xbf16>, vector<8x384xf32> -> vector<8x384xf32>
    %13 = vector.extract_strided_slice %10 {offsets = [0, 0], sizes = [8, 128], strides = [1, 1]} : vector<8x384xf32> to vector<8x128xf32>
    %14 = vector.extract_strided_slice %12 {offsets = [0, 0], sizes = [8, 128], strides = [1, 1]} : vector<8x384xf32> to vector<8x128xf32>
    %15 = arith.addf %13, %14 : vector<8x128xf32>
    %cst_9 = arith.constant 5.000000e-01 : f32
    %16 = vector.broadcast %cst_9 : f32 to vector<8x128xf32>
    %17 = arith.mulf %16, %15 : vector<8x128xf32>
    %18 = math.tanh %17 : vector<8x128xf32>
    %cst_10 = arith.constant 1.000000e+00 : f32
    %19 = vector.broadcast %cst_10 : f32 to vector<8x128xf32>
    %20 = arith.addf %18, %19 : vector<8x128xf32>
    %cst_11 = arith.constant 5.000000e-01 : f32
    %21 = vector.broadcast %cst_11 : f32 to vector<8x128xf32>
    %22 = arith.mulf %21, %20 : vector<8x128xf32>
    %23 = vector.extract_strided_slice %10 {offsets = [0, 128], sizes = [8, 128], strides = [1, 1]} : vector<8x384xf32> to vector<8x128xf32>
    %24 = vector.extract_strided_slice %12 {offsets = [0, 128], sizes = [8, 128], strides = [1, 1]} : vector<8x384xf32> to vector<8x128xf32>
    %25 = arith.addf %23, %24 : vector<8x128xf32>
    %cst_12 = arith.constant 5.000000e-01 : f32
    %26 = vector.broadcast %cst_12 : f32 to vector<8x128xf32>
    %27 = arith.mulf %26, %25 : vector<8x128xf32>
    %28 = math.tanh %27 : vector<8x128xf32>
    %cst_13 = arith.constant 1.000000e+00 : f32
    %29 = vector.broadcast %cst_13 : f32 to vector<8x128xf32>
    %30 = arith.addf %28, %29 : vector<8x128xf32>
    %cst_14 = arith.constant 5.000000e-01 : f32
    %31 = vector.broadcast %cst_14 : f32 to vector<8x128xf32>
    %32 = arith.mulf %31, %30 : vector<8x128xf32>
    %33 = vector.extract_strided_slice %10 {offsets = [0, 256], sizes = [8, 128], strides = [1, 1]} : vector<8x384xf32> to vector<8x128xf32>
    %34 = vector.extract_strided_slice %12 {offsets = [0, 256], sizes = [8, 128], strides = [1, 1]} : vector<8x384xf32> to vector<8x128xf32>
    %35 = arith.addf %34, %6 : vector<8x128xf32>
    %36 = arith.mulf %22, %35 : vector<8x128xf32>
    %37 = arith.addf %33, %36 : vector<8x128xf32>
    %38 = math.tanh %37 : vector<8x128xf32>
    %cst_15 = arith.constant 1.000000e+00 : f32
    %39 = vector.broadcast %cst_15 : f32 to vector<8x128xf32>
    %40 = arith.subf %39, %32 : vector<8x128xf32>
    %41 = arith.mulf %40, %38 : vector<8x128xf32>
    %42 = arith.mulf %32, %7 : vector<8x128xf32>
    %43 = arith.addf %41, %42 : vector<8x128xf32>
    %44 = arith.index_cast %c0_i32_6 : i32 to index
    %c0_16 = arith.constant 0 : index
    %c0_17 = arith.constant 0 : index
    %45 = vector.load %arg4[%44, %c0_16, %c0_17] : memref<8x8x128xf32, #tpu.memory_space<vmem>>, vector<1x8x128xf32>
    %46 = vector.shape_cast %45 : vector<1x8x128xf32> to vector<8x128xf32>
    %47 = vector.shape_cast %43 : vector<8x128xf32> to vector<1x8x128xf32>
    tpu.vector_store %arg4[%44, %c0_16, %c0_17], %47 {strides = array<i32>} : memref<8x8x128xf32, #tpu.memory_space<vmem>>, vector<1x8x128xf32>,
    %c1_i32 = arith.constant 1 : i32
    %48 = arith.index_cast %c1_i32 : i32 to index
    %c0_18 = arith.constant 0 : index
    %c0_19 = arith.constant 0 : index
    %49 = vector.load %arg1[%48, %c0_18, %c0_19] : memref<8x8x384xf32, #tpu.memory_space<vmem>>, vector<1x8x384xf32>
    %50 = vector.shape_cast %49 : vector<1x8x384xf32> to vector<8x384xf32>
    %51 = arith.truncf %43 : vector<8x128xf32> to vector<8x128xbf16>
    %cst_20 = arith.constant dense<0.000000e+00> : vector<8x384xf32>
    %52 = tpu.matmul %51, %3, %cst_20 {dimension_numbers = #tpu.dot_dimension_numbers<[1], [0], [0], [1], [0, 0, 1, 1], [], []>} : vector<8x128xbf16>, vector<128x384xbf16>, vector<8x384xf32> -> vector<8x384xf32>
    %53 = vector.extract_strided_slice %50 {offsets = [0, 0], sizes = [8, 128], strides = [1, 1]} : vector<8x384xf32> to vector<8x128xf32>
    %54 = vector.extract_strided_slice %52 {offsets = [0, 0], sizes = [8, 128], strides = [1, 1]} : vector<8x384xf32> to vector<8x128xf32>
    %55 = arith.addf %53, %54 : vector<8x128xf32>
    %cst_21 = arith.constant 5.000000e-01 : f32
    %56 = vector.broadcast %cst_21 : f32 to vector<8x128xf32>
    %57 = arith.mulf %56, %55 : vector<8x128xf32>
    %58 = math.tanh %57 : vector<8x128xf32>
    %cst_22 = arith.constant 1.000000e+00 : f32
    %59 = vector.broadcast %cst_22 : f32 to vector<8x128xf32>
    %60 = arith.addf %58, %59 : vector<8x128xf32>
    %cst_23 = arith.constant 5.000000e-01 : f32
    %61 = vector.broadcast %cst_23 : f32 to vector<8x128xf32>
    %62 = arith.mulf %61, %60 : vector<8x128xf32>
    %63 = vector.extract_strided_slice %50 {offsets = [0, 128], sizes = [8, 128], strides = [1, 1]} : vector<8x384xf32> to vector<8x128xf32>
    %64 = vector.extract_strided_slice %52 {offsets = [0, 128], sizes = [8, 128], strides = [1, 1]} : vector<8x384xf32> to vector<8x128xf32>
    %65 = arith.addf %63, %64 : vector<8x128xf32>
    %cst_24 = arith.constant 5.000000e-01 : f32
    %66 = vector.broadcast %cst_24 : f32 to vector<8x128xf32>
    %67 = arith.mulf %66, %65 : vector<8x128xf32>
    %68 = math.tanh %67 : vector<8x128xf32>
    %cst_25 = arith.constant 1.000000e+00 : f32
    %69 = vector.broadcast %cst_25 : f32 to vector<8x128xf32>
    %70 = arith.addf %68, %69 : vector<8x128xf32>
    %cst_26 = arith.constant 5.000000e-01 : f32
    %71 = vector.broadcast %cst_26 : f32 to vector<8x128xf32>
    %72 = arith.mulf %71, %70 : vector<8x128xf32>
    %73 = vector.extract_strided_slice %50 {offsets = [0, 256], sizes = [8, 128], strides = [1, 1]} : vector<8x384xf32> to vector<8x128xf32>
    %74 = vector.extract_strided_slice %52 {offsets = [0, 256], sizes = [8, 128], strides = [1, 1]} : vector<8x384xf32> to vector<8x128xf32>
    %75 = arith.addf %74, %6 : vector<8x128xf32>
    %76 = arith.mulf %62, %75 : vector<8x128xf32>
    %77 = arith.addf %73, %76 : vector<8x128xf32>
    %78 = math.tanh %77 : vector<8x128xf32>
    %cst_27 = arith.constant 1.000000e+00 : f32
    %79 = vector.broadcast %cst_27 : f32 to vector<8x128xf32>
    %80 = arith.subf %79, %72 : vector<8x128xf32>
    %81 = arith.mulf %80, %78 : vector<8x128xf32>
    %82 = arith.mulf %72, %43 : vector<8x128xf32>
    %83 = arith.addf %81, %82 : vector<8x128xf32>
    %84 = arith.index_cast %c1_i32 : i32 to index
    %c0_28 = arith.constant 0 : index
    %c0_29 = arith.constant 0 : index
    %85 = vector.load %arg4[%84, %c0_28, %c0_29] : memref<8x8x128xf32, #tpu.memory_space<vmem>>, vector<1x8x128xf32>
    %86 = vector.shape_cast %85 : vector<1x8x128xf32> to vector<8x128xf32>
    %87 = vector.shape_cast %83 : vector<8x128xf32> to vector<1x8x128xf32>
    tpu.vector_store %arg4[%84, %c0_28, %c0_29], %87 {strides = array<i32>} : memref<8x8x128xf32, #tpu.memory_space<vmem>>, vector<1x8x128xf32>,
    %c2_i32 = arith.constant 2 : i32
    %88 = arith.index_cast %c2_i32 : i32 to index
    %c0_30 = arith.constant 0 : index
    %c0_31 = arith.constant 0 : index
    %89 = vector.load %arg1[%88, %c0_30, %c0_31] : memref<8x8x384xf32, #tpu.memory_space<vmem>>, vector<1x8x384xf32>
    %90 = vector.shape_cast %89 : vector<1x8x384xf32> to vector<8x384xf32>
    %91 = arith.truncf %83 : vector<8x128xf32> to vector<8x128xbf16>
    %cst_32 = arith.constant dense<0.000000e+00> : vector<8x384xf32>
    %92 = tpu.matmul %91, %3, %cst_32 {dimension_numbers = #tpu.dot_dimension_numbers<[1], [0], [0], [1], [0, 0, 1, 1], [], []>} : vector<8x128xbf16>, vector<128x384xbf16>, vector<8x384xf32> -> vector<8x384xf32>
    %93 = vector.extract_strided_slice %90 {offsets = [0, 0], sizes = [8, 128], strides = [1, 1]} : vector<8x384xf32> to vector<8x128xf32>
    %94 = vector.extract_strided_slice %92 {offsets = [0, 0], sizes = [8, 128], strides = [1, 1]} : vector<8x384xf32> to vector<8x128xf32>
    %95 = arith.addf %93, %94 : vector<8x128xf32>
    %cst_33 = arith.constant 5.000000e-01 : f32
    %96 = vector.broadcast %cst_33 : f32 to vector<8x128xf32>
    %97 = arith.mulf %96, %95 : vector<8x128xf32>
    %98 = math.tanh %97 : vector<8x128xf32>
    %cst_34 = arith.constant 1.000000e+00 : f32
    %99 = vector.broadcast %cst_34 : f32 to vector<8x128xf32>
    %100 = arith.addf %98, %99 : vector<8x128xf32>
    %cst_35 = arith.constant 5.000000e-01 : f32
    %101 = vector.broadcast %cst_35 : f32 to vector<8x128xf32>
    %102 = arith.mulf %101, %100 : vector<8x128xf32>
    %103 = vector.extract_strided_slice %90 {offsets = [0, 128], sizes = [8, 128], strides = [1, 1]} : vector<8x384xf32> to vector<8x128xf32>
    %104 = vector.extract_strided_slice %92 {offsets = [0, 128], sizes = [8, 128], strides = [1, 1]} : vector<8x384xf32> to vector<8x128xf32>
    %105 = arith.addf %103, %104 : vector<8x128xf32>
    %cst_36 = arith.constant 5.000000e-01 : f32
    %106 = vector.broadcast %cst_36 : f32 to vector<8x128xf32>
    %107 = arith.mulf %106, %105 : vector<8x128xf32>
    %108 = math.tanh %107 : vector<8x128xf32>
    %cst_37 = arith.constant 1.000000e+00 : f32
    %109 = vector.broadcast %cst_37 : f32 to vector<8x128xf32>
    %110 = arith.addf %108, %109 : vector<8x128xf32>
    %cst_38 = arith.constant 5.000000e-01 : f32
    %111 = vector.broadcast %cst_38 : f32 to vector<8x128xf32>
    %112 = arith.mulf %111, %110 : vector<8x128xf32>
    %113 = vector.extract_strided_slice %90 {offsets = [0, 256], sizes = [8, 128], strides = [1, 1]} : vector<8x384xf32> to vector<8x128xf32>
    %114 = vector.extract_strided_slice %92 {offsets = [0, 256], sizes = [8, 128], strides = [1, 1]} : vector<8x384xf32> to vector<8x128xf32>
    %115 = arith.addf %114, %6 : vector<8x128xf32>
    %116 = arith.mulf %102, %115 : vector<8x128xf32>
    %117 = arith.addf %113, %116 : vector<8x128xf32>
    %118 = math.tanh %117 : vector<8x128xf32>
    %cst_39 = arith.constant 1.000000e+00 : f32
    %119 = vector.broadcast %cst_39 : f32 to vector<8x128xf32>
    %120 = arith.subf %119, %112 : vector<8x128xf32>
    %121 = arith.mulf %120, %118 : vector<8x128xf32>
    %122 = arith.mulf %112, %83 : vector<8x128xf32>
    %123 = arith.addf %121, %122 : vector<8x128xf32>
    %124 = arith.index_cast %c2_i32 : i32 to index
    %c0_40 = arith.constant 0 : index
    %c0_41 = arith.constant 0 : index
    %125 = vector.load %arg4[%124, %c0_40, %c0_41] : memref<8x8x128xf32, #tpu.memory_space<vmem>>, vector<1x8x128xf32>
    %126 = vector.shape_cast %125 : vector<1x8x128xf32> to vector<8x128xf32>
    %127 = vector.shape_cast %123 : vector<8x128xf32> to vector<1x8x128xf32>
    tpu.vector_store %arg4[%124, %c0_40, %c0_41], %127 {strides = array<i32>} : memref<8x8x128xf32, #tpu.memory_space<vmem>>, vector<1x8x128xf32>,
    %c3_i32 = arith.constant 3 : i32
    %128 = arith.index_cast %c3_i32 : i32 to index
    %c0_42 = arith.constant 0 : index
    %c0_43 = arith.constant 0 : index
    %129 = vector.load %arg1[%128, %c0_42, %c0_43] : memref<8x8x384xf32, #tpu.memory_space<vmem>>, vector<1x8x384xf32>
    %130 = vector.shape_cast %129 : vector<1x8x384xf32> to vector<8x384xf32>
    %131 = arith.truncf %123 : vector<8x128xf32> to vector<8x128xbf16>
    %cst_44 = arith.constant dense<0.000000e+00> : vector<8x384xf32>
    %132 = tpu.matmul %131, %3, %cst_44 {dimension_numbers = #tpu.dot_dimension_numbers<[1], [0], [0], [1], [0, 0, 1, 1], [], []>} : vector<8x128xbf16>, vector<128x384xbf16>, vector<8x384xf32> -> vector<8x384xf32>
    %133 = vector.extract_strided_slice %130 {offsets = [0, 0], sizes = [8, 128], strides = [1, 1]} : vector<8x384xf32> to vector<8x128xf32>
    %134 = vector.extract_strided_slice %132 {offsets = [0, 0], sizes = [8, 128], strides = [1, 1]} : vector<8x384xf32> to vector<8x128xf32>
    %135 = arith.addf %133, %134 : vector<8x128xf32>
    %cst_45 = arith.constant 5.000000e-01 : f32
    %136 = vector.broadcast %cst_45 : f32 to vector<8x128xf32>
    %137 = arith.mulf %136, %135 : vector<8x128xf32>
    %138 = math.tanh %137 : vector<8x128xf32>
    %cst_46 = arith.constant 1.000000e+00 : f32
    %139 = vector.broadcast %cst_46 : f32 to vector<8x128xf32>
    %140 = arith.addf %138, %139 : vector<8x128xf32>
    %cst_47 = arith.constant 5.000000e-01 : f32
    %141 = vector.broadcast %cst_47 : f32 to vector<8x128xf32>
    %142 = arith.mulf %141, %140 : vector<8x128xf32>
    %143 = vector.extract_strided_slice %130 {offsets = [0, 128], sizes = [8, 128], strides = [1, 1]} : vector<8x384xf32> to vector<8x128xf32>
    %144 = vector.extract_strided_slice %132 {offsets = [0, 128], sizes = [8, 128], strides = [1, 1]} : vector<8x384xf32> to vector<8x128xf32>
    %145 = arith.addf %143, %144 : vector<8x128xf32>
    %cst_48 = arith.constant 5.000000e-01 : f32
    %146 = vector.broadcast %cst_48 : f32 to vector<8x128xf32>
    %147 = arith.mulf %146, %145 : vector<8x128xf32>
    %148 = math.tanh %147 : vector<8x128xf32>
    %cst_49 = arith.constant 1.000000e+00 : f32
    %149 = vector.broadcast %cst_49 : f32 to vector<8x128xf32>
    %150 = arith.addf %148, %149 : vector<8x128xf32>
    %cst_50 = arith.constant 5.000000e-01 : f32
    %151 = vector.broadcast %cst_50 : f32 to vector<8x128xf32>
    %152 = arith.mulf %151, %150 : vector<8x128xf32>
    %153 = vector.extract_strided_slice %130 {offsets = [0, 256], sizes = [8, 128], strides = [1, 1]} : vector<8x384xf32> to vector<8x128xf32>
    %154 = vector.extract_strided_slice %132 {offsets = [0, 256], sizes = [8, 128], strides = [1, 1]} : vector<8x384xf32> to vector<8x128xf32>
    %155 = arith.addf %154, %6 : vector<8x128xf32>
    %156 = arith.mulf %142, %155 : vector<8x128xf32>
    %157 = arith.addf %153, %156 : vector<8x128xf32>
    %158 = math.tanh %157 : vector<8x128xf32>
    %cst_51 = arith.constant 1.000000e+00 : f32
    %159 = vector.broadcast %cst_51 : f32 to vector<8x128xf32>
    %160 = arith.subf %159, %152 : vector<8x128xf32>
    %161 = arith.mulf %160, %158 : vector<8x128xf32>
    %162 = arith.mulf %152, %123 : vector<8x128xf32>
    %163 = arith.addf %161, %162 : vector<8x128xf32>
    %164 = arith.index_cast %c3_i32 : i32 to index
    %c0_52 = arith.constant 0 : index
    %c0_53 = arith.constant 0 : index
    %165 = vector.load %arg4[%164, %c0_52, %c0_53] : memref<8x8x128xf32, #tpu.memory_space<vmem>>, vector<1x8x128xf32>
    %166 = vector.shape_cast %165 : vector<1x8x128xf32> to vector<8x128xf32>
    %167 = vector.shape_cast %163 : vector<8x128xf32> to vector<1x8x128xf32>
    tpu.vector_store %arg4[%164, %c0_52, %c0_53], %167 {strides = array<i32>} : memref<8x8x128xf32, #tpu.memory_space<vmem>>, vector<1x8x128xf32>,
    %c4_i32 = arith.constant 4 : i32
    %168 = arith.index_cast %c4_i32 : i32 to index
    %c0_54 = arith.constant 0 : index
    %c0_55 = arith.constant 0 : index
    %169 = vector.load %arg1[%168, %c0_54, %c0_55] : memref<8x8x384xf32, #tpu.memory_space<vmem>>, vector<1x8x384xf32>
    %170 = vector.shape_cast %169 : vector<1x8x384xf32> to vector<8x384xf32>
    %171 = arith.truncf %163 : vector<8x128xf32> to vector<8x128xbf16>
    %cst_56 = arith.constant dense<0.000000e+00> : vector<8x384xf32>
    %172 = tpu.matmul %171, %3, %cst_56 {dimension_numbers = #tpu.dot_dimension_numbers<[1], [0], [0], [1], [0, 0, 1, 1], [], []>} : vector<8x128xbf16>, vector<128x384xbf16>, vector<8x384xf32> -> vector<8x384xf32>
    %173 = vector.extract_strided_slice %170 {offsets = [0, 0], sizes = [8, 128], strides = [1, 1]} : vector<8x384xf32> to vector<8x128xf32>
    %174 = vector.extract_strided_slice %172 {offsets = [0, 0], sizes = [8, 128], strides = [1, 1]} : vector<8x384xf32> to vector<8x128xf32>
    %175 = arith.addf %173, %174 : vector<8x128xf32>
    %cst_57 = arith.constant 5.000000e-01 : f32
    %176 = vector.broadcast %cst_57 : f32 to vector<8x128xf32>
    %177 = arith.mulf %176, %175 : vector<8x128xf32>
    %178 = math.tanh %177 : vector<8x128xf32>
    %cst_58 = arith.constant 1.000000e+00 : f32
    %179 = vector.broadcast %cst_58 : f32 to vector<8x128xf32>
    %180 = arith.addf %178, %179 : vector<8x128xf32>
    %cst_59 = arith.constant 5.000000e-01 : f32
    %181 = vector.broadcast %cst_59 : f32 to vector<8x128xf32>
    %182 = arith.mulf %181, %180 : vector<8x128xf32>
    %183 = vector.extract_strided_slice %170 {offsets = [0, 128], sizes = [8, 128], strides = [1, 1]} : vector<8x384xf32> to vector<8x128xf32>
    %184 = vector.extract_strided_slice %172 {offsets = [0, 128], sizes = [8, 128], strides = [1, 1]} : vector<8x384xf32> to vector<8x128xf32>
    %185 = arith.addf %183, %184 : vector<8x128xf32>
    %cst_60 = arith.constant 5.000000e-01 : f32
    %186 = vector.broadcast %cst_60 : f32 to vector<8x128xf32>
    %187 = arith.mulf %186, %185 : vector<8x128xf32>
    %188 = math.tanh %187 : vector<8x128xf32>
    %cst_61 = arith.constant 1.000000e+00 : f32
    %189 = vector.broadcast %cst_61 : f32 to vector<8x128xf32>
    %190 = arith.addf %188, %189 : vector<8x128xf32>
    %cst_62 = arith.constant 5.000000e-01 : f32
    %191 = vector.broadcast %cst_62 : f32 to vector<8x128xf32>
    %192 = arith.mulf %191, %190 : vector<8x128xf32>
    %193 = vector.extract_strided_slice %170 {offsets = [0, 256], sizes = [8, 128], strides = [1, 1]} : vector<8x384xf32> to vector<8x128xf32>
    %194 = vector.extract_strided_slice %172 {offsets = [0, 256], sizes = [8, 128], strides = [1, 1]} : vector<8x384xf32> to vector<8x128xf32>
    %195 = arith.addf %194, %6 : vector<8x128xf32>
    %196 = arith.mulf %182, %195 : vector<8x128xf32>
    %197 = arith.addf %193, %196 : vector<8x128xf32>
    %198 = math.tanh %197 : vector<8x128xf32>
    %cst_63 = arith.constant 1.000000e+00 : f32
    %199 = vector.broadcast %cst_63 : f32 to vector<8x128xf32>
    %200 = arith.subf %199, %192 : vector<8x128xf32>
    %201 = arith.mulf %200, %198 : vector<8x128xf32>
    %202 = arith.mulf %192, %163 : vector<8x128xf32>
    %203 = arith.addf %201, %202 : vector<8x128xf32>
    %204 = arith.index_cast %c4_i32 : i32 to index
    %c0_64 = arith.constant 0 : index
    %c0_65 = arith.constant 0 : index
    %205 = vector.load %arg4[%204, %c0_64, %c0_65] : memref<8x8x128xf32, #tpu.memory_space<vmem>>, vector<1x8x128xf32>
    %206 = vector.shape_cast %205 : vector<1x8x128xf32> to vector<8x128xf32>
    %207 = vector.shape_cast %203 : vector<8x128xf32> to vector<1x8x128xf32>
    tpu.vector_store %arg4[%204, %c0_64, %c0_65], %207 {strides = array<i32>} : memref<8x8x128xf32, #tpu.memory_space<vmem>>, vector<1x8x128xf32>,
    %c5_i32 = arith.constant 5 : i32
    %208 = arith.index_cast %c5_i32 : i32 to index
    %c0_66 = arith.constant 0 : index
    %c0_67 = arith.constant 0 : index
    %209 = vector.load %arg1[%208, %c0_66, %c0_67] : memref<8x8x384xf32, #tpu.memory_space<vmem>>, vector<1x8x384xf32>
    %210 = vector.shape_cast %209 : vector<1x8x384xf32> to vector<8x384xf32>
    %211 = arith.truncf %203 : vector<8x128xf32> to vector<8x128xbf16>
    %cst_68 = arith.constant dense<0.000000e+00> : vector<8x384xf32>
    %212 = tpu.matmul %211, %3, %cst_68 {dimension_numbers = #tpu.dot_dimension_numbers<[1], [0], [0], [1], [0, 0, 1, 1], [], []>} : vector<8x128xbf16>, vector<128x384xbf16>, vector<8x384xf32> -> vector<8x384xf32>
    %213 = vector.extract_strided_slice %210 {offsets = [0, 0], sizes = [8, 128], strides = [1, 1]} : vector<8x384xf32> to vector<8x128xf32>
    %214 = vector.extract_strided_slice %212 {offsets = [0, 0], sizes = [8, 128], strides = [1, 1]} : vector<8x384xf32> to vector<8x128xf32>
    %215 = arith.addf %213, %214 : vector<8x128xf32>
    %cst_69 = arith.constant 5.000000e-01 : f32
    %216 = vector.broadcast %cst_69 : f32 to vector<8x128xf32>
    %217 = arith.mulf %216, %215 : vector<8x128xf32>
    %218 = math.tanh %217 : vector<8x128xf32>
    %cst_70 = arith.constant 1.000000e+00 : f32
    %219 = vector.broadcast %cst_70 : f32 to vector<8x128xf32>
    %220 = arith.addf %218, %219 : vector<8x128xf32>
    %cst_71 = arith.constant 5.000000e-01 : f32
    %221 = vector.broadcast %cst_71 : f32 to vector<8x128xf32>
    %222 = arith.mulf %221, %220 : vector<8x128xf32>
    %223 = vector.extract_strided_slice %210 {offsets = [0, 128], sizes = [8, 128], strides = [1, 1]} : vector<8x384xf32> to vector<8x128xf32>
    %224 = vector.extract_strided_slice %212 {offsets = [0, 128], sizes = [8, 128], strides = [1, 1]} : vector<8x384xf32> to vector<8x128xf32>
    %225 = arith.addf %223, %224 : vector<8x128xf32>
    %cst_72 = arith.constant 5.000000e-01 : f32
    %226 = vector.broadcast %cst_72 : f32 to vector<8x128xf32>
    %227 = arith.mulf %226, %225 : vector<8x128xf32>
    %228 = math.tanh %227 : vector<8x128xf32>
    %cst_73 = arith.constant 1.000000e+00 : f32
    %229 = vector.broadcast %cst_73 : f32 to vector<8x128xf32>
    %230 = arith.addf %228, %229 : vector<8x128xf32>
    %cst_74 = arith.constant 5.000000e-01 : f32
    %231 = vector.broadcast %cst_74 : f32 to vector<8x128xf32>
    %232 = arith.mulf %231, %230 : vector<8x128xf32>
    %233 = vector.extract_strided_slice %210 {offsets = [0, 256], sizes = [8, 128], strides = [1, 1]} : vector<8x384xf32> to vector<8x128xf32>
    %234 = vector.extract_strided_slice %212 {offsets = [0, 256], sizes = [8, 128], strides = [1, 1]} : vector<8x384xf32> to vector<8x128xf32>
    %235 = arith.addf %234, %6 : vector<8x128xf32>
    %236 = arith.mulf %222, %235 : vector<8x128xf32>
    %237 = arith.addf %233, %236 : vector<8x128xf32>
    %238 = math.tanh %237 : vector<8x128xf32>
    %cst_75 = arith.constant 1.000000e+00 : f32
    %239 = vector.broadcast %cst_75 : f32 to vector<8x128xf32>
    %240 = arith.subf %239, %232 : vector<8x128xf32>
    %241 = arith.mulf %240, %238 : vector<8x128xf32>
    %242 = arith.mulf %232, %203 : vector<8x128xf32>
    %243 = arith.addf %241, %242 : vector<8x128xf32>
    %244 = arith.index_cast %c5_i32 : i32 to index
    %c0_76 = arith.constant 0 : index
    %c0_77 = arith.constant 0 : index
    %245 = vector.load %arg4[%244, %c0_76, %c0_77] : memref<8x8x128xf32, #tpu.memory_space<vmem>>, vector<1x8x128xf32>
    %246 = vector.shape_cast %245 : vector<1x8x128xf32> to vector<8x128xf32>
    %247 = vector.shape_cast %243 : vector<8x128xf32> to vector<1x8x128xf32>
    tpu.vector_store %arg4[%244, %c0_76, %c0_77], %247 {strides = array<i32>} : memref<8x8x128xf32, #tpu.memory_space<vmem>>, vector<1x8x128xf32>,
    %c6_i32 = arith.constant 6 : i32
    %248 = arith.index_cast %c6_i32 : i32 to index
    %c0_78 = arith.constant 0 : index
    %c0_79 = arith.constant 0 : index
    %249 = vector.load %arg1[%248, %c0_78, %c0_79] : memref<8x8x384xf32, #tpu.memory_space<vmem>>, vector<1x8x384xf32>
    %250 = vector.shape_cast %249 : vector<1x8x384xf32> to vector<8x384xf32>
    %251 = arith.truncf %243 : vector<8x128xf32> to vector<8x128xbf16>
    %cst_80 = arith.constant dense<0.000000e+00> : vector<8x384xf32>
    %252 = tpu.matmul %251, %3, %cst_80 {dimension_numbers = #tpu.dot_dimension_numbers<[1], [0], [0], [1], [0, 0, 1, 1], [], []>} : vector<8x128xbf16>, vector<128x384xbf16>, vector<8x384xf32> -> vector<8x384xf32>
    %253 = vector.extract_strided_slice %250 {offsets = [0, 0], sizes = [8, 128], strides = [1, 1]} : vector<8x384xf32> to vector<8x128xf32>
    %254 = vector.extract_strided_slice %252 {offsets = [0, 0], sizes = [8, 128], strides = [1, 1]} : vector<8x384xf32> to vector<8x128xf32>
    %255 = arith.addf %253, %254 : vector<8x128xf32>
    %cst_81 = arith.constant 5.000000e-01 : f32
    %256 = vector.broadcast %cst_81 : f32 to vector<8x128xf32>
    %257 = arith.mulf %256, %255 : vector<8x128xf32>
    %258 = math.tanh %257 : vector<8x128xf32>
    %cst_82 = arith.constant 1.000000e+00 : f32
    %259 = vector.broadcast %cst_82 : f32 to vector<8x128xf32>
    %260 = arith.addf %258, %259 : vector<8x128xf32>
    %cst_83 = arith.constant 5.000000e-01 : f32
    %261 = vector.broadcast %cst_83 : f32 to vector<8x128xf32>
    %262 = arith.mulf %261, %260 : vector<8x128xf32>
    %263 = vector.extract_strided_slice %250 {offsets = [0, 128], sizes = [8, 128], strides = [1, 1]} : vector<8x384xf32> to vector<8x128xf32>
    %264 = vector.extract_strided_slice %252 {offsets = [0, 128], sizes = [8, 128], strides = [1, 1]} : vector<8x384xf32> to vector<8x128xf32>
    %265 = arith.addf %263, %264 : vector<8x128xf32>
    %cst_84 = arith.constant 5.000000e-01 : f32
    %266 = vector.broadcast %cst_84 : f32 to vector<8x128xf32>
    %267 = arith.mulf %266, %265 : vector<8x128xf32>
    %268 = math.tanh %267 : vector<8x128xf32>
    %cst_85 = arith.constant 1.000000e+00 : f32
    %269 = vector.broadcast %cst_85 : f32 to vector<8x128xf32>
    %270 = arith.addf %268, %269 : vector<8x128xf32>
    %cst_86 = arith.constant 5.000000e-01 : f32
    %271 = vector.broadcast %cst_86 : f32 to vector<8x128xf32>
    %272 = arith.mulf %271, %270 : vector<8x128xf32>
    %273 = vector.extract_strided_slice %250 {offsets = [0, 256], sizes = [8, 128], strides = [1, 1]} : vector<8x384xf32> to vector<8x128xf32>
    %274 = vector.extract_strided_slice %252 {offsets = [0, 256], sizes = [8, 128], strides = [1, 1]} : vector<8x384xf32> to vector<8x128xf32>
    %275 = arith.addf %274, %6 : vector<8x128xf32>
    %276 = arith.mulf %262, %275 : vector<8x128xf32>
    %277 = arith.addf %273, %276 : vector<8x128xf32>
    %278 = math.tanh %277 : vector<8x128xf32>
    %cst_87 = arith.constant 1.000000e+00 : f32
    %279 = vector.broadcast %cst_87 : f32 to vector<8x128xf32>
    %280 = arith.subf %279, %272 : vector<8x128xf32>
    %281 = arith.mulf %280, %278 : vector<8x128xf32>
    %282 = arith.mulf %272, %243 : vector<8x128xf32>
    %283 = arith.addf %281, %282 : vector<8x128xf32>
    %284 = arith.index_cast %c6_i32 : i32 to index
    %c0_88 = arith.constant 0 : index
    %c0_89 = arith.constant 0 : index
    %285 = vector.load %arg4[%284, %c0_88, %c0_89] : memref<8x8x128xf32, #tpu.memory_space<vmem>>, vector<1x8x128xf32>
    %286 = vector.shape_cast %285 : vector<1x8x128xf32> to vector<8x128xf32>
    %287 = vector.shape_cast %283 : vector<8x128xf32> to vector<1x8x128xf32>
    tpu.vector_store %arg4[%284, %c0_88, %c0_89], %287 {strides = array<i32>} : memref<8x8x128xf32, #tpu.memory_space<vmem>>, vector<1x8x128xf32>,
    %c7_i32 = arith.constant 7 : i32
    %288 = arith.index_cast %c7_i32 : i32 to index
    %c0_90 = arith.constant 0 : index
    %c0_91 = arith.constant 0 : index
    %289 = vector.load %arg1[%288, %c0_90, %c0_91] : memref<8x8x384xf32, #tpu.memory_space<vmem>>, vector<1x8x384xf32>
    %290 = vector.shape_cast %289 : vector<1x8x384xf32> to vector<8x384xf32>
    %291 = arith.truncf %283 : vector<8x128xf32> to vector<8x128xbf16>
    %cst_92 = arith.constant dense<0.000000e+00> : vector<8x384xf32>
    %292 = tpu.matmul %291, %3, %cst_92 {dimension_numbers = #tpu.dot_dimension_numbers<[1], [0], [0], [1], [0, 0, 1, 1], [], []>} : vector<8x128xbf16>, vector<128x384xbf16>, vector<8x384xf32> -> vector<8x384xf32>
    %293 = vector.extract_strided_slice %290 {offsets = [0, 0], sizes = [8, 128], strides = [1, 1]} : vector<8x384xf32> to vector<8x128xf32>
    %294 = vector.extract_strided_slice %292 {offsets = [0, 0], sizes = [8, 128], strides = [1, 1]} : vector<8x384xf32> to vector<8x128xf32>
    %295 = arith.addf %293, %294 : vector<8x128xf32>
    %cst_93 = arith.constant 5.000000e-01 : f32
    %296 = vector.broadcast %cst_93 : f32 to vector<8x128xf32>
    %297 = arith.mulf %296, %295 : vector<8x128xf32>
    %298 = math.tanh %297 : vector<8x128xf32>
    %cst_94 = arith.constant 1.000000e+00 : f32
    %299 = vector.broadcast %cst_94 : f32 to vector<8x128xf32>
    %300 = arith.addf %298, %299 : vector<8x128xf32>
    %cst_95 = arith.constant 5.000000e-01 : f32
    %301 = vector.broadcast %cst_95 : f32 to vector<8x128xf32>
    %302 = arith.mulf %301, %300 : vector<8x128xf32>
    %303 = vector.extract_strided_slice %290 {offsets = [0, 128], sizes = [8, 128], strides = [1, 1]} : vector<8x384xf32> to vector<8x128xf32>
    %304 = vector.extract_strided_slice %292 {offsets = [0, 128], sizes = [8, 128], strides = [1, 1]} : vector<8x384xf32> to vector<8x128xf32>
    %305 = arith.addf %303, %304 : vector<8x128xf32>
    %cst_96 = arith.constant 5.000000e-01 : f32
    %306 = vector.broadcast %cst_96 : f32 to vector<8x128xf32>
    %307 = arith.mulf %306, %305 : vector<8x128xf32>
    %308 = math.tanh %307 : vector<8x128xf32>
    %cst_97 = arith.constant 1.000000e+00 : f32
    %309 = vector.broadcast %cst_97 : f32 to vector<8x128xf32>
    %310 = arith.addf %308, %309 : vector<8x128xf32>
    %cst_98 = arith.constant 5.000000e-01 : f32
    %311 = vector.broadcast %cst_98 : f32 to vector<8x128xf32>
    %312 = arith.mulf %311, %310 : vector<8x128xf32>
    %313 = vector.extract_strided_slice %290 {offsets = [0, 256], sizes = [8, 128], strides = [1, 1]} : vector<8x384xf32> to vector<8x128xf32>
    %314 = vector.extract_strided_slice %292 {offsets = [0, 256], sizes = [8, 128], strides = [1, 1]} : vector<8x384xf32> to vector<8x128xf32>
    %315 = arith.addf %314, %6 : vector<8x128xf32>
    %316 = arith.mulf %302, %315 : vector<8x128xf32>
    %317 = arith.addf %313, %316 : vector<8x128xf32>
    %318 = math.tanh %317 : vector<8x128xf32>
    %cst_99 = arith.constant 1.000000e+00 : f32
    %319 = vector.broadcast %cst_99 : f32 to vector<8x128xf32>
    %320 = arith.subf %319, %312 : vector<8x128xf32>
    %321 = arith.mulf %320, %318 : vector<8x128xf32>
    %322 = arith.mulf %312, %283 : vector<8x128xf32>
    %323 = arith.addf %321, %322 : vector<8x128xf32>
    %324 = arith.index_cast %c7_i32 : i32 to index
    %c0_100 = arith.constant 0 : index
    %c0_101 = arith.constant 0 : index
    %325 = vector.load %arg4[%324, %c0_100, %c0_101] : memref<8x8x128xf32, #tpu.memory_space<vmem>>, vector<1x8x128xf32>
    %326 = vector.shape_cast %325 : vector<1x8x128xf32> to vector<8x128xf32>
    %327 = vector.shape_cast %323 : vector<8x128xf32> to vector<1x8x128xf32>
    tpu.vector_store %arg4[%324, %c0_100, %c0_101], %327 {strides = array<i32>} : memref<8x8x128xf32, #tpu.memory_space<vmem>>, vector<1x8x128xf32>,
    %c8_i32 = arith.constant 8 : i32
    %c0_102 = arith.constant 0 : index
    %c0_103 = arith.constant 0 : index
    %328 = vector.load %arg5[%c0_102, %c0_103] : memref<8x128xf32, #tpu.memory_space<vmem>>, vector<8x128xf32>
    tpu.vector_store %arg5[%c0_102, %c0_103], %323 {strides = array<i32>} : memref<8x128xf32, #tpu.memory_space<vmem>>, vector<8x128xf32>,
    return
  }
  func.func @transform_0(%arg0: i32) -> (i32, i32, i32) {
    %c0_i32 = arith.constant 0 : i32
    %c0_i32_0 = arith.constant 0 : i32
    %c0_i32_1 = arith.constant 0 : i32
    return %arg0, %c0_i32, %c0_i32_0 : i32, i32, i32
  }
  func.func @transform_1(%arg0: i32) -> (i32, i32) {
    %c0_i32 = arith.constant 0 : i32
    %c0_i32_0 = arith.constant 0 : i32
    %c0_i32_1 = arith.constant 0 : i32
    return %c0_i32, %c0_i32_0 : i32, i32
  }
  func.func @transform_2(%arg0: i32) -> (i32, i32) {
    %c0_i32 = arith.constant 0 : i32
    %c0_i32_0 = arith.constant 0 : i32
    %c0_i32_1 = arith.constant 0 : i32
    return %c0_i32, %c0_i32_0 : i32, i32
  }
  func.func @transform_3(%arg0: i32) -> (i32, i32, i32) {
    %c0_i32 = arith.constant 0 : i32
    %c0_i32_0 = arith.constant 0 : i32
    %c0_i32_1 = arith.constant 0 : i32
    return %arg0, %c0_i32, %c0_i32_0 : i32, i32, i32
  }
}

</mosaic_0001>

<llo_original>
// kernel: encoder_forward.2
$region0: #{encoder_forward.2}
  #allocation0 [shape = 'u32[]', space=smem, size = 0x4, offset = 0x4, fixed_abs, tag = 'smem constant byte address 0x4 - core index']
  #allocation1 [shape = 'u32[144,128]{1,0:T(1,128)}', space=vmem, size = 0x12000, scoped, tag = 'internal scratch']
  #allocation2 [shape = 'f32[8,128]{1,0:T(8,128)}', space=vmem, size = 0x1000, scoped, tag = 'scratch operand']
  %s0 = inlined_call_operand.vmem [shape: f32[8,8,384], index: 0, kind: input, shape index: {}]
  %s1 = inlined_call_operand.vmem [shape: bf16[128,384], index: 1, kind: input, shape index: {}]
  %s2 = inlined_call_operand.vmem [shape: f32[1,128], index: 2, kind: input, shape index: {}]
  %s3 = inlined_call_operand.vmem [shape: f32[8,8,128], index: 3, kind: output, shape index: {}]
  %s4 = sld [smem:[#allocation0]]
  $region26: #{encoder_forward.2} parent=0
    _
  %s6 = ssub.s32 1, %s4
  %s7 = scalar_select 0, %s6, %s4
  // Predicated region
  $region2: #{encoder_forward.2} parent=0 // pred_check
    _
  $region3: #{encoder_forward.2} parent=0 // pred_check_branch
    %9 = sbr.rel (0) target = $region5
  $region4: #{encoder_forward.2} parent=0 // pred_region
    _
  $region5: #{encoder_forward.2} parent=0 // pred_fallthru
    _
  // Predicated region
  $region6: #{encoder_forward.2} parent=0 // pred_check
    _
  $region7: #{encoder_forward.2} parent=0 // pred_check_branch
    %11 = sbr.rel (0) target = $region9
  $region8: #{encoder_forward.2} parent=0 // pred_region
    _
  $region9: #{encoder_forward.2} parent=0 // pred_fallthru
    _
  // Predicated region
  $region10: #{encoder_forward.2} parent=0 // pred_check
    _
  $region11: #{encoder_forward.2} parent=0 // pred_check_branch
    %13 = sbr.rel (0) target = $region13
  $region12: #{encoder_forward.2} parent=0 // pred_region
    _
  $region13: #{encoder_forward.2} parent=0 // pred_fallthru
    _
  %p15 = scmp.eq.s32.totalorder 0, 0
  // Predicated region
  $region14: #{encoder_forward.2} parent=0 // pred_check
    %p16 = pneg %p15
  $region15: #{encoder_forward.2} parent=0 // pred_check_branch
    %18 = sbr.rel (%p16) target = $region17
  $region16: #{encoder_forward.2} parent=0 // pred_region
    %19 = vst [vmem:[#allocation2] sm:$0xff] 0.0
  $region17: #{encoder_forward.2} parent=0 // pred_fallthru
    _
  %v20 = vld [vmem:[%s1] sm:$0xff]
  %v21 = vld [vmem:[%s1 + $0x8] sm:$0xf]
  %v22 = vld [vmem:[%s1 + $0xc] sm:$0xff]
  %v23 = vld [vmem:[%s1 + $0x14] sm:$0xf]
  %v24 = vld [vmem:[%s1 + $0x18] sm:$0xff]
  %v25 = vld [vmem:[%s1 + $0x20] sm:$0xf]
  %v26 = vld [vmem:[%s1 + $0x24] sm:$0xff]
  %v27 = vld [vmem:[%s1 + $0x2c] sm:$0xf]
  %v28 = vld [vmem:[%s1 + $0x30] sm:$0xff]
  %v29 = vld [vmem:[%s1 + $0x38] sm:$0xf]
  %v30 = vld [vmem:[%s1 + $0x3c] sm:$0xff]
  %v31 = vld [vmem:[%s1 + $0x44] sm:$0xf]
  %v32 = vld [vmem:[%s1 + $0x48] sm:$0xff]
  %v33 = vld [vmem:[%s1 + $0x50] sm:$0xf]
  %v34 = vld [vmem:[%s1 + $0x54] sm:$0xff]
  %v35 = vld [vmem:[%s1 + $0x5c] sm:$0xf]
  %v36 = vld [vmem:[%s1 + $0x60] sm:$0xff]
  %v37 = vld [vmem:[%s1 + $0x68] sm:$0xf]
  %v38 = vld [vmem:[%s1 + $0x6c] sm:$0xff]
  %v39 = vld [vmem:[%s1 + $0x74] sm:$0xf]
  %v40 = vld [vmem:[%s1 + $0x78] sm:$0xff]
  %v41 = vld [vmem:[%s1 + $0x80] sm:$0xf]
  %v42 = vld [vmem:[%s1 + $0x84] sm:$0xff]
  %v43 = vld [vmem:[%s1 + $0x8c] sm:$0xf]
  %v44 = vld [vmem:[%s1 + $0x90] sm:$0xff]
  %v45 = vld [vmem:[%s1 + $0x98] sm:$0xf]
  %v46 = vld [vmem:[%s1 + $0x9c] sm:$0xff]
  %v47 = vld [vmem:[%s1 + $0xa4] sm:$0xf]
  %v48 = vld [vmem:[%s1 + $0xa8] sm:$0xff]
  %v49 = vld [vmem:[%s1 + $0xb0] sm:$0xf]
  %v50 = vld [vmem:[%s1 + $0xb4] sm:$0xff]
  %v51 = vld [vmem:[%s1 + $0xbc] sm:$0xf]
  %v52 = vld [vmem:[%s2] sm:$0x1]
  %v54 = vlaneseq
  %v55 = vshrl.u32 %v54, 7
  %v56 = vsub.s32 0, %v55
  %v57 = vrot.slane %v52, %v56
  %v59 = vld [vmem:[#allocation2] sm:$0xff]
  %v60 = vld [vmem:[%s0] sm:$0xff]
  %v61 = vld [vmem:[%s0 + $0x8] sm:$0xff]
  %v62 = vld [vmem:[%s0 + $0x10] sm:$0xff]
  %v63 = vpack.c.bf16 %v59, %v59
  %v96 = vunpack.c.l.b16 %v20
  %v97 = vunpack.c.h.b16 %v20
  %v98 = vunpack.c.l.b16 %v21
  %v99 = vunpack.c.l.b16 %v22
  %v100 = vunpack.c.h.b16 %v22
  %v101 = vunpack.c.l.b16 %v23
  %v102 = vunpack.c.l.b16 %v24
  %v103 = vunpack.c.h.b16 %v24
  %v104 = vunpack.c.l.b16 %v25
  %v105 = vunpack.c.l.b16 %v26
  %v106 = vunpack.c.h.b16 %v26
  %v107 = vunpack.c.l.b16 %v27
  %v108 = vunpack.c.l.b16 %v28
  %v109 = vunpack.c.h.b16 %v28
  %v110 = vunpack.c.l.b16 %v29
  %v111 = vunpack.c.l.b16 %v30
  %v112 = vunpack.c.h.b16 %v30
  %v113 = vunpack.c.l.b16 %v31
  %v114 = vunpack.c.l.b16 %v32
  %v115 = vunpack.c.h.b16 %v32
  %v116 = vunpack.c.l.b16 %v33
  %v117 = vunpack.c.l.b16 %v34
  %v118 = vunpack.c.h.b16 %v34
  %v119 = vunpack.c.l.b16 %v35
  %v120 = vunpack.c.l.b16 %v36
  %v121 = vunpack.c.h.b16 %v36
  %v122 = vunpack.c.l.b16 %v37
  %v123 = vunpack.c.l.b16 %v38
  %v124 = vunpack.c.h.b16 %v38
  %v125 = vunpack.c.l.b16 %v39
  %v126 = vunpack.c.l.b16 %v40
  %v127 = vunpack.c.h.b16 %v40
  %v128 = vunpack.c.l.b16 %v41
  %v129 = vunpack.c.l.b16 %v42
  %v130 = vunpack.c.h.b16 %v42
  %v131 = vunpack.c.l.b16 %v43
  %v132 = vunpack.c.l.b16 %v44
  %v133 = vunpack.c.h.b16 %v44
  %v134 = vunpack.c.l.b16 %v45
  %v135 = vunpack.c.l.b16 %v46
  %v136 = vunpack.c.h.b16 %v46
  %v137 = vunpack.c.l.b16 %v47
  %v138 = vunpack.c.l.b16 %v48
  %v139 = vunpack.c.h.b16 %v48
  %v140 = vunpack.c.l.b16 %v49
  %v141 = vunpack.c.l.b16 %v50
  %v142 = vunpack.c.h.b16 %v50
  %v143 = vunpack.c.l.b16 %v51
  %v144 = vpack.c.b16 %v99, %v96
  %v145 = vpack.c.b16 %v100, %v97
  %v146 = vpack.c.b16 %v101, %v98
  %v147 = vpack.c.b16 %v105, %v102
  %v148 = vpack.c.b16 %v106, %v103
  %v149 = vpack.c.b16 %v107, %v104
  %v150 = vpack.c.b16 %v111, %v108
  %v151 = vpack.c.b16 %v112, %v109
  %v152 = vpack.c.b16 %v113, %v110
  %v153 = vpack.c.b16 %v117, %v114
  %v154 = vpack.c.b16 %v118, %v115
  %v155 = vpack.c.b16 %v119, %v116
  %v156 = vpack.c.b16 %v123, %v120
  %v157 = vpack.c.b16 %v124, %v121
  %v158 = vpack.c.b16 %v125, %v122
  %v159 = vpack.c.b16 %v129, %v126
  %v160 = vpack.c.b16 %v130, %v127
  %v161 = vpack.c.b16 %v131, %v128
  %v162 = vpack.c.b16 %v135, %v132
  %v163 = vpack.c.b16 %v136, %v133
  %v164 = vpack.c.b16 %v137, %v134
  %v165 = vpack.c.b16 %v141, %v138
  %v166 = vpack.c.b16 %v142, %v139
  %v167 = vpack.c.b16 %v143, %v140
  %192 = vmatprep.subr.bf16.mxu0 %v166
  %193 = vmatpush1.bf16.msra.mxu0 %v165
  %194 = vmatprep.subr.bf16.mxu0 %v163
  %195 = vmatpush1.bf16.msra.mxu0 %v162
  %196 = vmatprep.subr.bf16.mxu0 %v160
  %197 = vmatpush1.bf16.msra.mxu0 %v159
  %198 = vmatprep.subr.bf16.mxu0 %v157
  %199 = vmatpush1.bf16.msra.mxu0 %v156
  %200 = vmatprep.subr.bf16.mxu0 %v154
  %201 = vmatpush1.bf16.msra.mxu0 %v153
  %202 = vmatprep.subr.bf16.mxu0 %v151
  %203 = vmatpush1.bf16.msra.mxu0 %v150
  %204 = vmatprep.subr.bf16.mxu0 %v148
  %205 = vmatpush1.bf16.msra.mxu0 %v147
  %206 = vmatprep.subr.bf16.mxu0 %v145
  %207 = vmatpush1.bf16.msra.mxu0 %v144
  %208 = vmatprep.subr.bf16.mxu0 0
  %209 = vmatpush2.bf16.msra.mxu0 0
  %210 = vmatprep.subr.bf16.mxu0 0
  %211 = vmatpush2.bf16.msra.mxu0 0
  %212 = vmatprep.subr.bf16.mxu0 0
  %213 = vmatpush2.bf16.msra.mxu0 0
  %214 = vmatprep.subr.bf16.mxu0 0
  %215 = vmatpush2.bf16.msra.mxu0 0
  %216 = vmatprep.subr.bf16.mxu0 0
  %217 = vmatpush2.bf16.msra.mxu0 0
  %218 = vmatprep.subr.bf16.mxu0 0
  %219 = vmatpush2.bf16.msra.mxu0 0
  %220 = vmatprep.subr.bf16.mxu0 0
  %221 = vmatpush2.bf16.msra.mxu0 0
  %222 = vmatprep.subr.bf16.mxu0 0
  %223 = vmatpush2.bf16.msra.mxu0 0
  %224 = vmatprep.mubr.bf16.mxu0 0
  %225 = vmatmul.mubr.bf16.gmra.mxu0 %v63
  %v226 = vpop.f32.mrf.mxu0
  %v227 = vadd.f32 0.0, %v226
  %v228 = vpop.f32.mrf.mxu0
  %v229 = vadd.f32 0.0, %v228
  %v230 = vpop.f32.mrf.mxu0
  %v231 = vpop.f32.mrf.mxu0
  %232 = vdwg.mxu0
  %233 = vmatprep.subr.bf16.mxu0 0
  %234 = vmatpush1.bf16.msra.mxu0 %v167
  %235 = vmatprep.subr.bf16.mxu0 0
  %236 = vmatpush1.bf16.msra.mxu0 %v164
  %237 = vmatprep.subr.bf16.mxu0 0
  %238 = vmatpush1.bf16.msra.mxu0 %v161
  %239 = vmatprep.subr.bf16.mxu0 0
  %240 = vmatpush1.bf16.msra.mxu0 %v158
  %241 = vmatprep.subr.bf16.mxu0 0
  %242 = vmatpush1.bf16.msra.mxu0 %v155
  %243 = vmatprep.subr.bf16.mxu0 0
  %244 = vmatpush1.bf16.msra.mxu0 %v152
  %245 = vmatprep.subr.bf16.mxu0 0
  %246 = vmatpush1.bf16.msra.mxu0 %v149
  %247 = vmatprep.subr.bf16.mxu0 0
  %248 = vmatpush1.bf16.msra.mxu0 %v146
  %249 = vmatprep.subr.bf16.mxu0 0
  %250 = vmatpush2.bf16.msra.mxu0 0
  %251 = vmatprep.subr.bf16.mxu0 0
  %252 = vmatpush2.bf16.msra.mxu0 0
  %253 = vmatprep.subr.bf16.mxu0 0
  %254 = vmatpush2.bf16.msra.mxu0 0
  %255 = vmatprep.subr.bf16.mxu0 0
  %256 = vmatpush2.bf16.msra.mxu0 0
  %257 = vmatprep.subr.bf16.mxu0 0
  %258 = vmatpush2.bf16.msra.mxu0 0
  %259 = vmatprep.subr.bf16.mxu0 0
  %260 = vmatpush2.bf16.msra.mxu0 0
  %261 = vmatprep.subr.bf16.mxu0 0
  %262 = vmatpush2.bf16.msra.mxu0 0
  %263 = vmatprep.subr.bf16.mxu0 0
  %264 = vmatpush2.bf16.msra.mxu0 0
  %265 = vmatprep.mubr.bf16.mxu0 0
  %266 = vmatmul.mubr.bf16.gmra.mxu0 %v63
  %v267 = vpop.f32.mrf.mxu0
  %v268 = vadd.f32 0.0, %v267
  %v269 = vpop.f32.mrf.mxu0
  %v270 = vpop.f32.mrf.mxu0
  %v271 = vpop.f32.mrf.mxu0
  %272 = vdwg.mxu0
  %v273 = vadd.f32 %v60, %v227
  %v274 = vmul.f32 %v273, 0.5
  %v275 = vtanh.pop %v274
  %v276 = vadd.f32 %v275, 1.0
  %v277 = vmul.f32 %v276, 0.5
  %v278 = vadd.f32 %v61, %v229
  %v279 = vmul.f32 %v278, 0.5
  %v280 = vtanh.pop %v279
  %v281 = vadd.f32 %v280, 1.0
  %v282 = vmul.f32 %v281, 0.5
  %v283 = vadd.f32 %v268, %v57
  %v284 = vmul.f32 %v277, %v283
  %v285 = vadd.f32 %v62, %v284
  %v286 = vtanh.pop %v285
  %v287 = vsub.f32 1.0, %v282
  %v288 = vmul.f32 %v287, %v286
  %v289 = vmul.f32 %v282, %v59
  %v290 = vadd.f32 %v288, %v289
  %291 = vst [vmem:[%s3] sm:$0xff] %v290
  %s292 = scalar_lea.vmem %s0, 24
  %v293 = vld [vmem:[%s292] sm:$0xff]
  %v294 = vld [vmem:[%s292 + $0x8] sm:$0xff]
  %v295 = vld [vmem:[%s292 + $0x10] sm:$0xff]
  %v296 = vpack.c.bf16 %v290, %v290
  %297 = vmatprep.subr.bf16.mxu0 %v166
  %298 = vmatpush1.bf16.msra.mxu0 %v165
  %299 = vmatprep.subr.bf16.mxu0 %v163
  %300 = vmatpush1.bf16.msra.mxu0 %v162
  %301 = vmatprep.subr.bf16.mxu0 %v160
  %302 = vmatpush1.bf16.msra.mxu0 %v159
  %303 = vmatprep.subr.bf16.mxu0 %v157
  %304 = vmatpush1.bf16.msra.mxu0 %v156
  %305 = vmatprep.subr.bf16.mxu0 %v154
  %306 = vmatpush1.bf16.msra.mxu0 %v153
  %307 = vmatprep.subr.bf16.mxu0 %v151
  %308 = vmatpush1.bf16.msra.mxu0 %v150
  %309 = vmatprep.subr.bf16.mxu0 %v148
  %310 = vmatpush1.bf16.msra.mxu0 %v147
  %311 = vmatprep.subr.bf16.mxu0 %v145
  %312 = vmatpush1.bf16.msra.mxu0 %v144
  %313 = vmatprep.subr.bf16.mxu0 0
  %314 = vmatpush2.bf16.msra.mxu0 0
  %315 = vmatprep.subr.bf16.mxu0 0
  %316 = vmatpush2.bf16.msra.mxu0 0
  %317 = vmatprep.subr.bf16.mxu0 0
  %318 = vmatpush2.bf16.msra.mxu0 0
  %319 = vmatprep.subr.bf16.mxu0 0
  %320 = vmatpush2.bf16.msra.mxu0 0
  %321 = vmatprep.subr.bf16.mxu0 0
  %322 = vmatpush2.bf16.msra.mxu0 0
  %323 = vmatprep.subr.bf16.mxu0 0
  %324 = vmatpush2.bf16.msra.mxu0 0
  %325 = vmatprep.subr.bf16.mxu0 0
  %326 = vmatpush2.bf16.msra.mxu0 0
  %327 = vmatprep.subr.bf16.mxu0 0
  %328 = vmatpush2.bf16.msra.mxu0 0
  %329 = vmatprep.mubr.bf16.mxu0 0
  %330 = vmatmul.mubr.bf16.gmra.mxu0 %v296
  %v331 = vpop.f32.mrf.mxu0
  %v332 = vadd.f32 0.0, %v331
  %v333 = vpop.f32.mrf.mxu0
  %v334 = vadd.f32 0.0, %v333
  %v335 = vpop.f32.mrf.mxu0
  %v336 = vpop.f32.mrf.mxu0
  %337 = vdwg.mxu0
  %338 = vmatprep.subr.bf16.mxu0 0
  %339 = vmatpush1.bf16.msra.mxu0 %v167
  %340 = vmatprep.subr.bf16.mxu0 0
  %341 = vmatpush1.bf16.msra.mxu0 %v164
  %342 = vmatprep.subr.bf16.mxu0 0
  %343 = vmatpush1.bf16.msra.mxu0 %v161
  %344 = vmatprep.subr.bf16.mxu0 0
  %345 = vmatpush1.bf16.msra.mxu0 %v158
  %346 = vmatprep.subr.bf16.mxu0 0
  %347 = vmatpush1.bf16.msra.mxu0 %v155
  %348 = vmatprep.subr.bf16.mxu0 0
  %349 = vmatpush1.bf16.msra.mxu0 %v152
  %350 = vmatprep.subr.bf16.mxu0 0
  %351 = vmatpush1.bf16.msra.mxu0 %v149
  %352 = vmatprep.subr.bf16.mxu0 0
  %353 = vmatpush1.bf16.msra.mxu0 %v146
  %354 = vmatprep.subr.bf16.mxu0 0
  %355 = vmatpush2.bf16.msra.mxu0 0
  %356 = vmatprep.subr.bf16.mxu0 0
  %357 = vmatpush2.bf16.msra.mxu0 0
  %358 = vmatprep.subr.bf16.mxu0 0
  %359 = vmatpush2.bf16.msra.mxu0 0
  %360 = vmatprep.subr.bf16.mxu0 0
  %361 = vmatpush2.bf16.msra.mxu0 0
  %362 = vmatprep.subr.bf16.mxu0 0
  %363 = vmatpush2.bf16.msra.mxu0 0
  %364 = vmatprep.subr.bf16.mxu0 0
  %365 = vmatpush2.bf16.msra.mxu0 0
  %366 = vmatprep.subr.bf16.mxu0 0
  %367 = vmatpush2.bf16.msra.mxu0 0
  %368 = vmatprep.subr.bf16.mxu0 0
  %369 = vmatpush2.bf16.msra.mxu0 0
  %370 = vmatprep.mubr.bf16.mxu0 0
  %371 = vmatmul.mubr.bf16.gmra.mxu0 %v296
  %v372 = vpop.f32.mrf.mxu0
  %v373 = vadd.f32 0.0, %v372
  %v374 = vpop.f32.mrf.mxu0
  %v375 = vpop.f32.mrf.mxu0
  %v376 = vpop.f32.mrf.mxu0
  %377 = vdwg.mxu0
  %v378 = vadd.f32 %v293, %v332
  %v379 = vmul.f32 %v378, 0.5
  %v380 = vtanh.pop %v379
  %v381 = vadd.f32 %v380, 1.0
  %v382 = vmul.f32 %v381, 0.5
  %v383 = vadd.f32 %v294, %v334
  %v384 = vmul.f32 %v383, 0.5
  %v385 = vtanh.pop %v384
  %v386 = vadd.f32 %v385, 1.0
  %v387 = vmul.f32 %v386, 0.5
  %v388 = vadd.f32 %v373, %v57
  %v389 = vmul.f32 %v382, %v388
  %v390 = vadd.f32 %v295, %v389
  %v391 = vtanh.pop %v390
  %v392 = vsub.f32 1.0, %v387
  %v393 = vmul.f32 %v392, %v391
  %v394 = vmul.f32 %v387, %v290
  %v395 = vadd.f32 %v393, %v394
  %s396 = scalar_lea.vmem %s3, 8
  %397 = vst [vmem:[%s396] sm:$0xff] %v395
  %s398 = scalar_lea.vmem %s0, 48
  %v399 = vld [vmem:[%s398] sm:$0xff]
  %v400 = vld [vmem:[%s398 + $0x8] sm:$0xff]
  %v401 = vld [vmem:[%s398 + $0x10] sm:$0xff]
  %v402 = vpack.c.bf16 %v395, %v395
  %403 = vmatprep.subr.bf16.mxu0 %v166
  %404 = vmatpush1.bf16.msra.mxu0 %v165
  %405 = vmatprep.subr.bf16.mxu0 %v163
  %406 = vmatpush1.bf16.msra.mxu0 %v162
  %407 = vmatprep.subr.bf16.mxu0 %v160
  %408 = vmatpush1.bf16.msra.mxu0 %v159
  %409 = vmatprep.subr.bf16.mxu0 %v157
  %410 = vmatpush1.bf16.msra.mxu0 %v156
  %411 = vmatprep.subr.bf16.mxu0 %v154
  %412 = vmatpush1.bf16.msra.mxu0 %v153
  %413 = vmatprep.subr.bf16.mxu0 %v151
  %414 = vmatpush1.bf16.msra.mxu0 %v150
  %415 = vmatprep.subr.bf16.mxu0 %v148
  %416 = vmatpush1.bf16.msra.mxu0 %v147
  %417 = vmatprep.subr.bf16.mxu0 %v145
  %418 = vmatpush1.bf16.msra.mxu0 %v144
  %419 = vmatprep.subr.bf16.mxu0 0
  %420 = vmatpush2.bf16.msra.mxu0 0
  %421 = vmatprep.subr.bf16.mxu0 0
  %422 = vmatpush2.bf16.msra.mxu0 0
  %423 = vmatprep.subr.bf16.mxu0 0
  %424 = vmatpush2.bf16.msra.mxu0 0
  %425 = vmatprep.subr.bf16.mxu0 0
  %426 = vmatpush2.bf16.msra.mxu0 0
  %427 = vmatprep.subr.bf16.mxu0 0
  %428 = vmatpush2.bf16.msra.mxu0 0
  %429 = vmatprep.subr.bf16.mxu0 0
  %430 = vmatpush2.bf16.msra.mxu0 0
  %431 = vmatprep.subr.bf16.mxu0 0
  %432 = vmatpush2.bf16.msra.mxu0 0
  %433 = vmatprep.subr.bf16.mxu0 0
  %434 = vmatpush2.bf16.msra.mxu0 0
  %435 = vmatprep.mubr.bf16.mxu0 0
  %436 = vmatmul.mubr.bf16.gmra.mxu0 %v402
  %v437 = vpop.f32.mrf.mxu0
  %v438 = vadd.f32 0.0, %v437
  %v439 = vpop.f32.mrf.mxu0
  %v440 = vadd.f32 0.0, %v439
  %v441 = vpop.f32.mrf.mxu0
  %v442 = vpop.f32.mrf.mxu0
  %443 = vdwg.mxu0
  %444 = vmatprep.subr.bf16.mxu0 0
  %445 = vmatpush1.bf16.msra.mxu0 %v167
  %446 = vmatprep.subr.bf16.mxu0 0
  %447 = vmatpush1.bf16.msra.mxu0 %v164
  %448 = vmatprep.subr.bf16.mxu0 0
  %449 = vmatpush1.bf16.msra.mxu0 %v161
  %450 = vmatprep.subr.bf16.mxu0 0
  %451 = vmatpush1.bf16.msra.mxu0 %v158
  %452 = vmatprep.subr.bf16.mxu0 0
  %453 = vmatpush1.bf16.msra.mxu0 %v155
  %454 = vmatprep.subr.bf16.mxu0 0
  %455 = vmatpush1.bf16.msra.mxu0 %v152
  %456 = vmatprep.subr.bf16.mxu0 0
  %457 = vmatpush1.bf16.msra.mxu0 %v149
  %458 = vmatprep.subr.bf16.mxu0 0
  %459 = vmatpush1.bf16.msra.mxu0 %v146
  %460 = vmatprep.subr.bf16.mxu0 0
  %461 = vmatpush2.bf16.msra.mxu0 0
  %462 = vmatprep.subr.bf16.mxu0 0
  %463 = vmatpush2.bf16.msra.mxu0 0
  %464 = vmatprep.subr.bf16.mxu0 0
  %465 = vmatpush2.bf16.msra.mxu0 0
  %466 = vmatprep.subr.bf16.mxu0 0
  %467 = vmatpush2.bf16.msra.mxu0 0
  %468 = vmatprep.subr.bf16.mxu0 0
  %469 = vmatpush2.bf16.msra.mxu0 0
  %470 = vmatprep.subr.bf16.mxu0 0
  %471 = vmatpush2.bf16.msra.mxu0 0
  %472 = vmatprep.subr.bf16.mxu0 0
  %473 = vmatpush2.bf16.msra.mxu0 0
  %474 = vmatprep.subr.bf16.mxu0 0
  %475 = vmatpush2.bf16.msra.mxu0 0
  %476 = vmatprep.mubr.bf16.mxu0 0
  %477 = vmatmul.mubr.bf16.gmra.mxu0 %v402
  %v478 = vpop.f32.mrf.mxu0
  %v479 = vadd.f32 0.0, %v478
  %v480 = vpop.f32.mrf.mxu0
  %v481 = vpop.f32.mrf.mxu0
  %v482 = vpop.f32.mrf.mxu0
  %483 = vdwg.mxu0
  %v484 = vadd.f32 %v399, %v438
  %v485 = vmul.f32 %v484, 0.5
  %v486 = vtanh.pop %v485
  %v487 = vadd.f32 %v486, 1.0
  %v488 = vmul.f32 %v487, 0.5
  %v489 = vadd.f32 %v400, %v440
  %v490 = vmul.f32 %v489, 0.5
  %v491 = vtanh.pop %v490
  %v492 = vadd.f32 %v491, 1.0
  %v493 = vmul.f32 %v492, 0.5
  %v494 = vadd.f32 %v479, %v57
  %v495 = vmul.f32 %v488, %v494
  %v496 = vadd.f32 %v401, %v495
  %v497 = vtanh.pop %v496
  %v498 = vsub.f32 1.0, %v493
  %v499 = vmul.f32 %v498, %v497
  %v500 = vmul.f32 %v493, %v395
  %v501 = vadd.f32 %v499, %v500
  %s502 = scalar_lea.vmem %s3, 16
  %503 = vst [vmem:[%s502] sm:$0xff] %v501
  %s504 = scalar_lea.vmem %s0, 72
  %v505 = vld [vmem:[%s504] sm:$0xff]
  %v506 = vld [vmem:[%s504 + $0x8] sm:$0xff]
  %v507 = vld [vmem:[%s504 + $0x10] sm:$0xff]
  %v508 = vpack.c.bf16 %v501, %v501
  %509 = vmatprep.subr.bf16.mxu0 %v166
  %510 = vmatpush1.bf16.msra.mxu0 %v165
  %511 = vmatprep.subr.bf16.mxu0 %v163
  %512 = vmatpush1.bf16.msra.mxu0 %v162
  %513 = vmatprep.subr.bf16.mxu0 %v160
  %514 = vmatpush1.bf16.msra.mxu0 %v159
  %515 = vmatprep.subr.bf16.mxu0 %v157
  %516 = vmatpush1.bf16.msra.mxu0 %v156
  %517 = vmatprep.subr.bf16.mxu0 %v154
  %518 = vmatpush1.bf16.msra.mxu0 %v153
  %519 = vmatprep.subr.bf16.mxu0 %v151
  %520 = vmatpush1.bf16.msra.mxu0 %v150
  %521 = vmatprep.subr.bf16.mxu0 %v148
  %522 = vmatpush1.bf16.msra.mxu0 %v147
  %523 = vmatprep.subr.bf16.mxu0 %v145
  %524 = vmatpush1.bf16.msra.mxu0 %v144
  %525 = vmatprep.subr.bf16.mxu0 0
  %526 = vmatpush2.bf16.msra.mxu0 0
  %527 = vmatprep.subr.bf16.mxu0 0
  %528 = vmatpush2.bf16.msra.mxu0 0
  %529 = vmatprep.subr.bf16.mxu0 0
  %530 = vmatpush2.bf16.msra.mxu0 0
  %531 = vmatprep.subr.bf16.mxu0 0
  %532 = vmatpush2.bf16.msra.mxu0 0
  %533 = vmatprep.subr.bf16.mxu0 0
  %534 = vmatpush2.bf16.msra.mxu0 0
  %535 = vmatprep.subr.bf16.mxu0 0
  %536 = vmatpush2.bf16.msra.mxu0 0
  %537 = vmatprep.subr.bf16.mxu0 0
  %538 = vmatpush2.bf16.msra.mxu0 0
  %539 = vmatprep.subr.bf16.mxu0 0
  %540 = vmatpush2.bf16.msra.mxu0 0
  %541 = vmatprep.mubr.bf16.mxu0 0
  %542 = vmatmul.mubr.bf16.gmra.mxu0 %v508
  %v543 = vpop.f32.mrf.mxu0
  %v544 = vadd.f32 0.0, %v543
  %v545 = vpop.f32.mrf.mxu0
  %v546 = vadd.f32 0.0, %v545
  %v547 = vpop.f32.mrf.mxu0
  %v548 = vpop.f32.mrf.mxu0
  %549 = vdwg.mxu0
  %550 = vmatprep.subr.bf16.mxu0 0
  %551 = vmatpush1.bf16.msra.mxu0 %v167
  %552 = vmatprep.subr.bf16.mxu0 0
  %553 = vmatpush1.bf16.msra.mxu0 %v164
  %554 = vmatprep.subr.bf16.mxu0 0
  %555 = vmatpush1.bf16.msra.mxu0 %v161
  %556 = vmatprep.subr.bf16.mxu0 0
  %557 = vmatpush1.bf16.msra.mxu0 %v158
  %558 = vmatprep.subr.bf16.mxu0 0
  %559 = vmatpush1.bf16.msra.mxu0 %v155
  %560 = vmatprep.subr.bf16.mxu0 0
  %561 = vmatpush1.bf16.msra.mxu0 %v152
  %562 = vmatprep.subr.bf16.mxu0 0
  %563 = vmatpush1.bf16.msra.mxu0 %v149
  %564 = vmatprep.subr.bf16.mxu0 0
  %565 = vmatpush1.bf16.msra.mxu0 %v146
  %566 = vmatprep.subr.bf16.mxu0 0
  %567 = vmatpush2.bf16.msra.mxu0 0
  %568 = vmatprep.subr.bf16.mxu0 0
  %569 = vmatpush2.bf16.msra.mxu0 0
  %570 = vmatprep.subr.bf16.mxu0 0
  %571 = vmatpush2.bf16.msra.mxu0 0
  %572 = vmatprep.subr.bf16.mxu0 0
  %573 = vmatpush2.bf16.msra.mxu0 0
  %574 = vmatprep.subr.bf16.mxu0 0
  %575 = vmatpush2.bf16.msra.mxu0 0
  %576 = vmatprep.subr.bf16.mxu0 0
  %577 = vmatpush2.bf16.msra.mxu0 0
  %578 = vmatprep.subr.bf16.mxu0 0
  %579 = vmatpush2.bf16.msra.mxu0 0
  %580 = vmatprep.subr.bf16.mxu0 0
  %581 = vmatpush2.bf16.msra.mxu0 0
  %582 = vmatprep.mubr.bf16.mxu0 0
  %583 = vmatmul.mubr.bf16.gmra.mxu0 %v508
  %v584 = vpop.f32.mrf.mxu0
  %v585 = vadd.f32 0.0, %v584
  %v586 = vpop.f32.mrf.mxu0
  %v587 = vpop.f32.mrf.mxu0
  %v588 = vpop.f32.mrf.mxu0
  %589 = vdwg.mxu0
  %v590 = vadd.f32 %v505, %v544
  %v591 = vmul.f32 %v590, 0.5
  %v592 = vtanh.pop %v591
  %v593 = vadd.f32 %v592, 1.0
  %v594 = vmul.f32 %v593, 0.5
  %v595 = vadd.f32 %v506, %v546
  %v596 = vmul.f32 %v595, 0.5
  %v597 = vtanh.pop %v596
  %v598 = vadd.f32 %v597, 1.0
  %v599 = vmul.f32 %v598, 0.5
  %v600 = vadd.f32 %v585, %v57
  %v601 = vmul.f32 %v594, %v600
  %v602 = vadd.f32 %v507, %v601
  %v603 = vtanh.pop %v602
  %v604 = vsub.f32 1.0, %v599
  %v605 = vmul.f32 %v604, %v603
  %v606 = vmul.f32 %v599, %v501
  %v607 = vadd.f32 %v605, %v606
  %s608 = scalar_lea.vmem %s3, 24
  %609 = vst [vmem:[%s608] sm:$0xff] %v607
  %s610 = scalar_lea.vmem %s0, 96
  %v611 = vld [vmem:[%s610] sm:$0xff]
  %v612 = vld [vmem:[%s610 + $0x8] sm:$0xff]
  %v613 = vld [vmem:[%s610 + $0x10] sm:$0xff]
  %v614 = vpack.c.bf16 %v607, %v607
  %615 = vmatprep.subr.bf16.mxu0 %v166
  %616 = vmatpush1.bf16.msra.mxu0 %v165
  %617 = vmatprep.subr.bf16.mxu0 %v163
  %618 = vmatpush1.bf16.msra.mxu0 %v162
  %619 = vmatprep.subr.bf16.mxu0 %v160
  %620 = vmatpush1.bf16.msra.mxu0 %v159
  %621 = vmatprep.subr.bf16.mxu0 %v157
  %622 = vmatpush1.bf16.msra.mxu0 %v156
  %623 = vmatprep.subr.bf16.mxu0 %v154
  %624 = vmatpush1.bf16.msra.mxu0 %v153
  %625 = vmatprep.subr.bf16.mxu0 %v151
  %626 = vmatpush1.bf16.msra.mxu0 %v150
  %627 = vmatprep.subr.bf16.mxu0 %v148
  %628 = vmatpush1.bf16.msra.mxu0 %v147
  %629 = vmatprep.subr.bf16.mxu0 %v145
  %630 = vmatpush1.bf16.msra.mxu0 %v144
  %631 = vmatprep.subr.bf16.mxu0 0
  %632 = vmatpush2.bf16.msra.mxu0 0
  %633 = vmatprep.subr.bf16.mxu0 0
  %634 = vmatpush2.bf16.msra.mxu0 0
  %635 = vmatprep.subr.bf16.mxu0 0
  %636 = vmatpush2.bf16.msra.mxu0 0
  %637 = vmatprep.subr.bf16.mxu0 0
  %638 = vmatpush2.bf16.msra.mxu0 0
  %639 = vmatprep.subr.bf16.mxu0 0
  %640 = vmatpush2.bf16.msra.mxu0 0
  %641 = vmatprep.subr.bf16.mxu0 0
  %642 = vmatpush2.bf16.msra.mxu0 0
  %643 = vmatprep.subr.bf16.mxu0 0
  %644 = vmatpush2.bf16.msra.mxu0 0
  %645 = vmatprep.subr.bf16.mxu0 0
  %646 = vmatpush2.bf16.msra.mxu0 0
  %647 = vmatprep.mubr.bf16.mxu0 0
  %648 = vmatmul.mubr.bf16.gmra.mxu0 %v614
  %v649 = vpop.f32.mrf.mxu0
  %v650 = vadd.f32 0.0, %v649
  %v651 = vpop.f32.mrf.mxu0
  %v652 = vadd.f32 0.0, %v651
  %v653 = vpop.f32.mrf.mxu0
  %v654 = vpop.f32.mrf.mxu0
  %655 = vdwg.mxu0
  %656 = vmatprep.subr.bf16.mxu0 0
  %657 = vmatpush1.bf16.msra.mxu0 %v167
  %658 = vmatprep.subr.bf16.mxu0 0
  %659 = vmatpush1.bf16.msra.mxu0 %v164
  %660 = vmatprep.subr.bf16.mxu0 0
  %661 = vmatpush1.bf16.msra.mxu0 %v161
  %662 = vmatprep.subr.bf16.mxu0 0
  %663 = vmatpush1.bf16.msra.mxu0 %v158
  %664 = vmatprep.subr.bf16.mxu0 0
  %665 = vmatpush1.bf16.msra.mxu0 %v155
  %666 = vmatprep.subr.bf16.mxu0 0
  %667 = vmatpush1.bf16.msra.mxu0 %v152
  %668 = vmatprep.subr.bf16.mxu0 0
  %669 = vmatpush1.bf16.msra.mxu0 %v149
  %670 = vmatprep.subr.bf16.mxu0 0
  %671 = vmatpush1.bf16.msra.mxu0 %v146
  %672 = vmatprep.subr.bf16.mxu0 0
  %673 = vmatpush2.bf16.msra.mxu0 0
  %674 = vmatprep.subr.bf16.mxu0 0
  %675 = vmatpush2.bf16.msra.mxu0 0
  %676 = vmatprep.subr.bf16.mxu0 0
  %677 = vmatpush2.bf16.msra.mxu0 0
  %678 = vmatprep.subr.bf16.mxu0 0
  %679 = vmatpush2.bf16.msra.mxu0 0
  %680 = vmatprep.subr.bf16.mxu0 0
  %681 = vmatpush2.bf16.msra.mxu0 0
  %682 = vmatprep.subr.bf16.mxu0 0
  %683 = vmatpush2.bf16.msra.mxu0 0
  %684 = vmatprep.subr.bf16.mxu0 0
  %685 = vmatpush2.bf16.msra.mxu0 0
  %686 = vmatprep.subr.bf16.mxu0 0
  %687 = vmatpush2.bf16.msra.mxu0 0
  %688 = vmatprep.mubr.bf16.mxu0 0
  %689 = vmatmul.mubr.bf16.gmra.mxu0 %v614
  %v690 = vpop.f32.mrf.mxu0
  %v691 = vadd.f32 0.0, %v690
  %v692 = vpop.f32.mrf.mxu0
  %v693 = vpop.f32.mrf.mxu0
  %v694 = vpop.f32.mrf.mxu0
  %695 = vdwg.mxu0
  %v696 = vadd.f32 %v611, %v650
  %v697 = vmul.f32 %v696, 0.5
  %v698 = vtanh.pop %v697
  %v699 = vadd.f32 %v698, 1.0
  %v700 = vmul.f32 %v699, 0.5
  %v701 = vadd.f32 %v612, %v652
  %v702 = vmul.f32 %v701, 0.5
  %v703 = vtanh.pop %v702
  %v704 = vadd.f32 %v703, 1.0
  %v705 = vmul.f32 %v704, 0.5
  %v706 = vadd.f32 %v691, %v57
  %v707 = vmul.f32 %v700, %v706
  %v708 = vadd.f32 %v613, %v707
  %v709 = vtanh.pop %v708
  %v710 = vsub.f32 1.0, %v705
  %v711 = vmul.f32 %v710, %v709
  %v712 = vmul.f32 %v705, %v607
  %v713 = vadd.f32 %v711, %v712
  %s714 = scalar_lea.vmem %s3, 32
  %715 = vst [vmem:[%s714] sm:$0xff] %v713
  %s716 = scalar_lea.vmem %s0, 120
  %v717 = vld [vmem:[%s716] sm:$0xff]
  %v718 = vld [vmem:[%s716 + $0x8] sm:$0xff]
  %v719 = vld [vmem:[%s716 + $0x10] sm:$0xff]
  %v720 = vpack.c.bf16 %v713, %v713
  %721 = vmatprep.subr.bf16.mxu0 %v166
  %722 = vmatpush1.bf16.msra.mxu0 %v165
  %723 = vmatprep.subr.bf16.mxu0 %v163
  %724 = vmatpush1.bf16.msra.mxu0 %v162
  %725 = vmatprep.subr.bf16.mxu0 %v160
  %726 = vmatpush1.bf16.msra.mxu0 %v159
  %727 = vmatprep.subr.bf16.mxu0 %v157
  %728 = vmatpush1.bf16.msra.mxu0 %v156
  %729 = vmatprep.subr.bf16.mxu0 %v154
  %730 = vmatpush1.bf16.msra.mxu0 %v153
  %731 = vmatprep.subr.bf16.mxu0 %v151
  %732 = vmatpush1.bf16.msra.mxu0 %v150
  %733 = vmatprep.subr.bf16.mxu0 %v148
  %734 = vmatpush1.bf16.msra.mxu0 %v147
  %735 = vmatprep.subr.bf16.mxu0 %v145
  %736 = vmatpush1.bf16.msra.mxu0 %v144
  %737 = vmatprep.subr.bf16.mxu0 0
  %738 = vmatpush2.bf16.msra.mxu0 0
  %739 = vmatprep.subr.bf16.mxu0 0
  %740 = vmatpush2.bf16.msra.mxu0 0
  %741 = vmatprep.subr.bf16.mxu0 0
  %742 = vmatpush2.bf16.msra.mxu0 0
  %743 = vmatprep.subr.bf16.mxu0 0
  %744 = vmatpush2.bf16.msra.mxu0 0
  %745 = vmatprep.subr.bf16.mxu0 0
  %746 = vmatpush2.bf16.msra.mxu0 0
  %747 = vmatprep.subr.bf16.mxu0 0
  %748 = vmatpush2.bf16.msra.mxu0 0
  %749 = vmatprep.subr.bf16.mxu0 0
  %750 = vmatpush2.bf16.msra.mxu0 0
  %751 = vmatprep.subr.bf16.mxu0 0
  %752 = vmatpush2.bf16.msra.mxu0 0
  %753 = vmatprep.mubr.bf16.mxu0 0
  %754 = vmatmul.mubr.bf16.gmra.mxu0 %v720
  %v755 = vpop.f32.mrf.mxu0
  %v756 = vadd.f32 0.0, %v755
  %v757 = vpop.f32.mrf.mxu0
  %v758 = vadd.f32 0.0, %v757
  %v759 = vpop.f32.mrf.mxu0
  %v760 = vpop.f32.mrf.mxu0
  %761 = vdwg.mxu0
  %762 = vmatprep.subr.bf16.mxu0 0
  %763 = vmatpush1.bf16.msra.mxu0 %v167
  %764 = vmatprep.subr.bf16.mxu0 0
  %765 = vmatpush1.bf16.msra.mxu0 %v164
  %766 = vmatprep.subr.bf16.mxu0 0
  %767 = vmatpush1.bf16.msra.mxu0 %v161
  %768 = vmatprep.subr.bf16.mxu0 0
  %769 = vmatpush1.bf16.msra.mxu0 %v158
  %770 = vmatprep.subr.bf16.mxu0 0
  %771 = vmatpush1.bf16.msra.mxu0 %v155
  %772 = vmatprep.subr.bf16.mxu0 0
  %773 = vmatpush1.bf16.msra.mxu0 %v152
  %774 = vmatprep.subr.bf16.mxu0 0
  %775 = vmatpush1.bf16.msra.mxu0 %v149
  %776 = vmatprep.subr.bf16.mxu0 0
  %777 = vmatpush1.bf16.msra.mxu0 %v146
  %778 = vmatprep.subr.bf16.mxu0 0
  %779 = vmatpush2.bf16.msra.mxu0 0
  %780 = vmatprep.subr.bf16.mxu0 0
  %781 = vmatpush2.bf16.msra.mxu0 0
  %782 = vmatprep.subr.bf16.mxu0 0
  %783 = vmatpush2.bf16.msra.mxu0 0
  %784 = vmatprep.subr.bf16.mxu0 0
  %785 = vmatpush2.bf16.msra.mxu0 0
  %786 = vmatprep.subr.bf16.mxu0 0
  %787 = vmatpush2.bf16.msra.mxu0 0
  %788 = vmatprep.subr.bf16.mxu0 0
  %789 = vmatpush2.bf16.msra.mxu0 0
  %790 = vmatprep.subr.bf16.mxu0 0
  %791 = vmatpush2.bf16.msra.mxu0 0
  %792 = vmatprep.subr.bf16.mxu0 0
  %793 = vmatpush2.bf16.msra.mxu0 0
  %794 = vmatprep.mubr.bf16.mxu0 0
  %795 = vmatmul.mubr.bf16.gmra.mxu0 %v720
  %v796 = vpop.f32.mrf.mxu0
  %v797 = vadd.f32 0.0, %v796
  %v798 = vpop.f32.mrf.mxu0
  %v799 = vpop.f32.mrf.mxu0
  %v800 = vpop.f32.mrf.mxu0
  %801 = vdwg.mxu0
  %v802 = vadd.f32 %v717, %v756
  %v803 = vmul.f32 %v802, 0.5
  %v804 = vtanh.pop %v803
  %v805 = vadd.f32 %v804, 1.0
  %v806 = vmul.f32 %v805, 0.5
  %v807 = vadd.f32 %v718, %v758
  %v808 = vmul.f32 %v807, 0.5
  %v809 = vtanh.pop %v808
  %v810 = vadd.f32 %v809, 1.0
  %v811 = vmul.f32 %v810, 0.5
  %v812 = vadd.f32 %v797, %v57
  %v813 = vmul.f32 %v806, %v812
  %v814 = vadd.f32 %v719, %v813
  %v815 = vtanh.pop %v814
  %v816 = vsub.f32 1.0, %v811
  %v817 = vmul.f32 %v816, %v815
  %v818 = vmul.f32 %v811, %v713
  %v819 = vadd.f32 %v817, %v818
  %s820 = scalar_lea.vmem %s3, 40
  %821 = vst [vmem:[%s820] sm:$0xff] %v819
  %s822 = scalar_lea.vmem %s0, 144
  %v823 = vld [vmem:[%s822] sm:$0xff]
  %v824 = vld [vmem:[%s822 + $0x8] sm:$0xff]
  %v825 = vld [vmem:[%s822 + $0x10] sm:$0xff]
  %v826 = vpack.c.bf16 %v819, %v819
  %827 = vmatprep.subr.bf16.mxu0 %v166
  %828 = vmatpush1.bf16.msra.mxu0 %v165
  %829 = vmatprep.subr.bf16.mxu0 %v163
  %830 = vmatpush1.bf16.msra.mxu0 %v162
  %831 = vmatprep.subr.bf16.mxu0 %v160
  %832 = vmatpush1.bf16.msra.mxu0 %v159
  %833 = vmatprep.subr.bf16.mxu0 %v157
  %834 = vmatpush1.bf16.msra.mxu0 %v156
  %835 = vmatprep.subr.bf16.mxu0 %v154
  %836 = vmatpush1.bf16.msra.mxu0 %v153
  %837 = vmatprep.subr.bf16.mxu0 %v151
  %838 = vmatpush1.bf16.msra.mxu0 %v150
  %839 = vmatprep.subr.bf16.mxu0 %v148
  %840 = vmatpush1.bf16.msra.mxu0 %v147
  %841 = vmatprep.subr.bf16.mxu0 %v145
  %842 = vmatpush1.bf16.msra.mxu0 %v144
  %843 = vmatprep.subr.bf16.mxu0 0
  %844 = vmatpush2.bf16.msra.mxu0 0
  %845 = vmatprep.subr.bf16.mxu0 0
  %846 = vmatpush2.bf16.msra.mxu0 0
  %847 = vmatprep.subr.bf16.mxu0 0
  %848 = vmatpush2.bf16.msra.mxu0 0
  %849 = vmatprep.subr.bf16.mxu0 0
  %850 = vmatpush2.bf16.msra.mxu0 0
  %851 = vmatprep.subr.bf16.mxu0 0
  %852 = vmatpush2.bf16.msra.mxu0 0
  %853 = vmatprep.subr.bf16.mxu0 0
  %854 = vmatpush2.bf16.msra.mxu0 0
  %855 = vmatprep.subr.bf16.mxu0 0
  %856 = vmatpush2.bf16.msra.mxu0 0
  %857 = vmatprep.subr.bf16.mxu0 0
  %858 = vmatpush2.bf16.msra.mxu0 0
  %859 = vmatprep.mubr.bf16.mxu0 0
  %860 = vmatmul.mubr.bf16.gmra.mxu0 %v826
  %v861 = vpop.f32.mrf.mxu0
  %v862 = vadd.f32 0.0, %v861
  %v863 = vpop.f32.mrf.mxu0
  %v864 = vadd.f32 0.0, %v863
  %v865 = vpop.f32.mrf.mxu0
  %v866 = vpop.f32.mrf.mxu0
  %867 = vdwg.mxu0
  %868 = vmatprep.subr.bf16.mxu0 0
  %869 = vmatpush1.bf16.msra.mxu0 %v167
  %870 = vmatprep.subr.bf16.mxu0 0
  %871 = vmatpush1.bf16.msra.mxu0 %v164
  %872 = vmatprep.subr.bf16.mxu0 0
  %873 = vmatpush1.bf16.msra.mxu0 %v161
  %874 = vmatprep.subr.bf16.mxu0 0
  %875 = vmatpush1.bf16.msra.mxu0 %v158
  %876 = vmatprep.subr.bf16.mxu0 0
  %877 = vmatpush1.bf16.msra.mxu0 %v155
  %878 = vmatprep.subr.bf16.mxu0 0
  %879 = vmatpush1.bf16.msra.mxu0 %v152
  %880 = vmatprep.subr.bf16.mxu0 0
  %881 = vmatpush1.bf16.msra.mxu0 %v149
  %882 = vmatprep.subr.bf16.mxu0 0
  %883 = vmatpush1.bf16.msra.mxu0 %v146
  %884 = vmatprep.subr.bf16.mxu0 0
  %885 = vmatpush2.bf16.msra.mxu0 0
  %886 = vmatprep.subr.bf16.mxu0 0
  %887 = vmatpush2.bf16.msra.mxu0 0
  %888 = vmatprep.subr.bf16.mxu0 0
  %889 = vmatpush2.bf16.msra.mxu0 0
  %890 = vmatprep.subr.bf16.mxu0 0
  %891 = vmatpush2.bf16.msra.mxu0 0
  %892 = vmatprep.subr.bf16.mxu0 0
  %893 = vmatpush2.bf16.msra.mxu0 0
  %894 = vmatprep.subr.bf16.mxu0 0
  %895 = vmatpush2.bf16.msra.mxu0 0
  %896 = vmatprep.subr.bf16.mxu0 0
  %897 = vmatpush2.bf16.msra.mxu0 0
  %898 = vmatprep.subr.bf16.mxu0 0
  %899 = vmatpush2.bf16.msra.mxu0 0
  %900 = vmatprep.mubr.bf16.mxu0 0
  %901 = vmatmul.mubr.bf16.gmra.mxu0 %v826
  %v902 = vpop.f32.mrf.mxu0
  %v903 = vadd.f32 0.0, %v902
  %v904 = vpop.f32.mrf.mxu0
  %v905 = vpop.f32.mrf.mxu0
  %v906 = vpop.f32.mrf.mxu0
  %907 = vdwg.mxu0
  %v908 = vadd.f32 %v823, %v862
  %v909 = vmul.f32 %v908, 0.5
  %v910 = vtanh.pop %v909
  %v911 = vadd.f32 %v910, 1.0
  %v912 = vmul.f32 %v911, 0.5
  %v913 = vadd.f32 %v824, %v864
  %v914 = vmul.f32 %v913, 0.5
  %v915 = vtanh.pop %v914
  %v916 = vadd.f32 %v915, 1.0
  %v917 = vmul.f32 %v916, 0.5
  %v918 = vadd.f32 %v903, %v57
  %v919 = vmul.f32 %v912, %v918
  %v920 = vadd.f32 %v825, %v919
  %v921 = vtanh.pop %v920
  %v922 = vsub.f32 1.0, %v917
  %v923 = vmul.f32 %v922, %v921
  %v924 = vmul.f32 %v917, %v819
  %v925 = vadd.f32 %v923, %v924
  %s926 = scalar_lea.vmem %s3, 48
  %927 = vst [vmem:[%s926] sm:$0xff] %v925
  %s928 = scalar_lea.vmem %s0, 168
  %v929 = vld [vmem:[%s928] sm:$0xff]
  %v930 = vld [vmem:[%s928 + $0x8] sm:$0xff]
  %v931 = vld [vmem:[%s928 + $0x10] sm:$0xff]
  %v932 = vpack.c.bf16 %v925, %v925
  %933 = vmatprep.subr.bf16.mxu0 %v166
  %934 = vmatpush1.bf16.msra.mxu0 %v165
  %935 = vmatprep.subr.bf16.mxu0 %v163
  %936 = vmatpush1.bf16.msra.mxu0 %v162
  %937 = vmatprep.subr.bf16.mxu0 %v160
  %938 = vmatpush1.bf16.msra.mxu0 %v159
  %939 = vmatprep.subr.bf16.mxu0 %v157
  %940 = vmatpush1.bf16.msra.mxu0 %v156
  %941 = vmatprep.subr.bf16.mxu0 %v154
  %942 = vmatpush1.bf16.msra.mxu0 %v153
  %943 = vmatprep.subr.bf16.mxu0 %v151
  %944 = vmatpush1.bf16.msra.mxu0 %v150
  %945 = vmatprep.subr.bf16.mxu0 %v148
  %946 = vmatpush1.bf16.msra.mxu0 %v147
  %947 = vmatprep.subr.bf16.mxu0 %v145
  %948 = vmatpush1.bf16.msra.mxu0 %v144
  %949 = vmatprep.subr.bf16.mxu0 0
  %950 = vmatpush2.bf16.msra.mxu0 0
  %951 = vmatprep.subr.bf16.mxu0 0
  %952 = vmatpush2.bf16.msra.mxu0 0
  %953 = vmatprep.subr.bf16.mxu0 0
  %954 = vmatpush2.bf16.msra.mxu0 0
  %955 = vmatprep.subr.bf16.mxu0 0
  %956 = vmatpush2.bf16.msra.mxu0 0
  %957 = vmatprep.subr.bf16.mxu0 0
  %958 = vmatpush2.bf16.msra.mxu0 0
  %959 = vmatprep.subr.bf16.mxu0 0
  %960 = vmatpush2.bf16.msra.mxu0 0
  %961 = vmatprep.subr.bf16.mxu0 0
  %962 = vmatpush2.bf16.msra.mxu0 0
  %963 = vmatprep.subr.bf16.mxu0 0
  %964 = vmatpush2.bf16.msra.mxu0 0
  %965 = vmatprep.mubr.bf16.mxu0 0
  %966 = vmatmul.mubr.bf16.gmra.mxu0 %v932
  %v967 = vpop.f32.mrf.mxu0
  %v968 = vadd.f32 0.0, %v967
  %v969 = vpop.f32.mrf.mxu0
  %v970 = vadd.f32 0.0, %v969
  %v971 = vpop.f32.mrf.mxu0
  %v972 = vpop.f32.mrf.mxu0
  %973 = vdwg.mxu0
  %974 = vmatprep.subr.bf16.mxu0 0
  %975 = vmatpush1.bf16.msra.mxu0 %v167
  %976 = vmatprep.subr.bf16.mxu0 0
  %977 = vmatpush1.bf16.msra.mxu0 %v164
  %978 = vmatprep.subr.bf16.mxu0 0
  %979 = vmatpush1.bf16.msra.mxu0 %v161
  %980 = vmatprep.subr.bf16.mxu0 0
  %981 = vmatpush1.bf16.msra.mxu0 %v158
  %982 = vmatprep.subr.bf16.mxu0 0
  %983 = vmatpush1.bf16.msra.mxu0 %v155
  %984 = vmatprep.subr.bf16.mxu0 0
  %985 = vmatpush1.bf16.msra.mxu0 %v152
  %986 = vmatprep.subr.bf16.mxu0 0
  %987 = vmatpush1.bf16.msra.mxu0 %v149
  %988 = vmatprep.subr.bf16.mxu0 0
  %989 = vmatpush1.bf16.msra.mxu0 %v146
  %990 = vmatprep.subr.bf16.mxu0 0
  %991 = vmatpush2.bf16.msra.mxu0 0
  %992 = vmatprep.subr.bf16.mxu0 0
  %993 = vmatpush2.bf16.msra.mxu0 0
  %994 = vmatprep.subr.bf16.mxu0 0
  %995 = vmatpush2.bf16.msra.mxu0 0
  %996 = vmatprep.subr.bf16.mxu0 0
  %997 = vmatpush2.bf16.msra.mxu0 0
  %998 = vmatprep.subr.bf16.mxu0 0
  %999 = vmatpush2.bf16.msra.mxu0 0
  %1000 = vmatprep.subr.bf16.mxu0 0
  %1001 = vmatpush2.bf16.msra.mxu0 0
  %1002 = vmatprep.subr.bf16.mxu0 0
  %1003 = vmatpush2.bf16.msra.mxu0 0
  %1004 = vmatprep.subr.bf16.mxu0 0
  %1005 = vmatpush2.bf16.msra.mxu0 0
  %1006 = vmatprep.mubr.bf16.mxu0 0
  %1007 = vmatmul.mubr.bf16.gmra.mxu0 %v932
  %v1008 = vpop.f32.mrf.mxu0
  %v1009 = vadd.f32 0.0, %v1008
  %v1010 = vpop.f32.mrf.mxu0
  %v1011 = vpop.f32.mrf.mxu0
  %v1012 = vpop.f32.mrf.mxu0
  %1013 = vdwg.mxu0
  %v1014 = vadd.f32 %v929, %v968
  %v1015 = vmul.f32 %v1014, 0.5
  %v1016 = vtanh.pop %v1015
  %v1017 = vadd.f32 %v1016, 1.0
  %v1018 = vmul.f32 %v1017, 0.5
  %v1019 = vadd.f32 %v930, %v970
  %v1020 = vmul.f32 %v1019, 0.5
  %v1021 = vtanh.pop %v1020
  %v1022 = vadd.f32 %v1021, 1.0
  %v1023 = vmul.f32 %v1022, 0.5
  %v1024 = vadd.f32 %v1009, %v57
  %v1025 = vmul.f32 %v1018, %v1024
  %v1026 = vadd.f32 %v931, %v1025
  %v1027 = vtanh.pop %v1026
  %v1028 = vsub.f32 1.0, %v1023
  %v1029 = vmul.f32 %v1028, %v1027
  %v1030 = vmul.f32 %v1023, %v925
  %v1031 = vadd.f32 %v1029, %v1030
  %s1032 = scalar_lea.vmem %s3, 56
  %1033 = vst [vmem:[%s1032] sm:$0xff] %v1031
  %1034 = vst [vmem:[#allocation2] sm:$0xff] %v1031
  // Predicated region
  $region18: #{encoder_forward.2} parent=0 // pred_check
    _
  $region19: #{encoder_forward.2} parent=0 // pred_check_branch
    %1036 = sbr.rel (0) target = $region21
  $region20: #{encoder_forward.2} parent=0 // pred_region
    _
  $region21: #{encoder_forward.2} parent=0 // pred_fallthru
    _
  // Predicated region
  $region22: #{encoder_forward.2} parent=0 // pred_check
    _
  $region23: #{encoder_forward.2} parent=0 // pred_check_branch
    %1038 = sbr.rel (0) target = $region25
  $region24: #{encoder_forward.2} parent=0 // pred_region
    _
  $region25: #{encoder_forward.2} parent=0 // pred_fallthru
    _

</llo_original>
